<compile_context>
chip_gen: v5e
topology: v5e:2x2
jax: 0.10.0
libtpu: 0.0.40
codegen_flags: <defaults>
</compile_context>

<pallas_src>
import functools

import jax
import jax.numpy as jnp
from jax.experimental import pallas as pl
from jax.experimental.pallas import tpu as pltpu


# ----------------------------------------------------------------------------
# Fused AST kernel (one grid step == one batch element, fully resident in VMEM)
# ----------------------------------------------------------------------------
def _ln(x, g, b, eps):
    mu = jnp.mean(x, axis=-1, keepdims=True)
    var = jnp.mean(jnp.square(x - mu), axis=-1, keepdims=True)
    return (x - mu) * jax.lax.rsqrt(var + eps) * g + b


def _ast_fused_kernel(
    patches_ref,            # (1, T, K)   zero rows 0..1, patch rows 2..T-1
    base_ref,               # (T, D)      cls/dist + patch bias + pos embed
    patch_w_ref,            # (K, D)
    ln1_g_ref, ln1_b_ref,   # (depth, 1, D)
    qkv_w_ref, qkv_b_ref,   # (depth, D, 3D), (depth, 1, 3D)
    proj_w_ref, proj_b_ref, # (depth, D, D),  (depth, 1, D)
    ln2_g_ref, ln2_b_ref,   # (depth, 1, D)
    fc1_w_ref, fc1_b_ref,   # (depth, D, M),  (depth, 1, M)
    fc2_w_ref, fc2_b_ref,   # (depth, M, D),  (depth, 1, D)
    norm_g_ref, norm_b_ref,         # (1, D)
    head_ln_g_ref, head_ln_b_ref,   # (1, D)
    head_w_ref, head_b_ref,         # (D, label_dim), (1, label_dim)
    out_ref,                        # (1, 1, label_dim)
    *, depth, num_heads, eps,
):
    x = patches_ref[0]                                           # (T, K)
    h = jnp.dot(x, patch_w_ref[...],
                preferred_element_type=jnp.float32) + base_ref[...]   # (T, D)
    D = h.shape[-1]
    Dh = D // num_heads
    scale = Dh ** -0.5

    for d in range(depth):                    # static unroll (depth is small)
        # ---------------- multi-head self-attention ----------------
        y = _ln(h, ln1_g_ref[d], ln1_b_ref[d], eps)
        qkv = jnp.dot(y, qkv_w_ref[d],
                      preferred_element_type=jnp.float32) + qkv_b_ref[d]  # (T, 3D)
        proj_w = proj_w_ref[d]                                            # (D, D)
        attn_proj = None
        for hd in range(num_heads):           # static unroll over heads
            qh = qkv[:, hd * Dh:(hd + 1) * Dh]                  # (T, Dh)
            kh = qkv[:, D + hd * Dh:D + (hd + 1) * Dh]          # (T, Dh)
            vh = qkv[:, 2 * D + hd * Dh:2 * D + (hd + 1) * Dh]  # (T, Dh)
            s = jnp.dot(qh, kh.T, preferred_element_type=jnp.float32) * scale
            s = s - jnp.max(s, axis=-1, keepdims=True)
            p = jnp.exp(s)
            p = p * pl.reciprocal(jnp.sum(p, axis=-1, keepdims=True),
                                  approx=True)
            oh = jnp.dot(p, vh, preferred_element_type=jnp.float32)  # (T, Dh)
            # concat(heads) @ proj_w  ==  sum_h  oh @ proj_w[h*Dh:(h+1)*Dh, :]
            contrib = jnp.dot(oh, proj_w[hd * Dh:(hd + 1) * Dh, :],
                              preferred_element_type=jnp.float32)
            attn_proj = contrib if attn_proj is None else attn_proj + contrib
        h = h + attn_proj + proj_b_ref[d]

        # ---------------- MLP ----------------
        y = _ln(h, ln2_g_ref[d], ln2_b_ref[d], eps)
        y = jnp.dot(y, fc1_w_ref[d],
                    preferred_element_type=jnp.float32) + fc1_b_ref[d]
        # TODO(synk): PyTorch nn.GELU defaults to exact erf-GELU; tanh approx
        # is used here for guaranteed TPU lowering (differs at ~1e-3 level).
        y = jax.nn.gelu(y, approximate=True)
        y = jnp.dot(y, fc2_w_ref[d],
                    preferred_element_type=jnp.float32) + fc2_b_ref[d]
        h = h + y

    # ---------------- final norm + distilled-token pooling + head ----------
    h = _ln(h, norm_g_ref[...], norm_b_ref[...], eps)
    pooled = (h[0:1, :] + h[1:2, :]) * 0.5                       # (1, D)
    pooled = _ln(pooled, head_ln_g_ref[...], head_ln_b_ref[...], eps)
    logits = jnp.dot(pooled, head_w_ref[...],
                     preferred_element_type=jnp.float32) + head_b_ref[...]
    out_ref[0] = logits                                          # (1, label_dim)


# ----------------------------------------------------------------------------
# Parameter init (xavier-uniform linears, zero bias, ones/zeros LayerNorm —
# mirrors _init_weights in the PyTorch module).  Per-block params are stacked
# along a leading `depth` axis so the whole model fits one pallas_call.
# ----------------------------------------------------------------------------
def init_params(key, *, in_patch_dim, embed_dim, depth, mlp_dim, num_tokens,
                label_dim):
    def dense(k, fan_in, fan_out):
        lim = (6.0 / (fan_in + fan_out)) ** 0.5
        w = jax.random.uniform(k, (fan_in, fan_out), jnp.float32, -lim, lim)
        b = jnp.zeros((1, fan_out), jnp.float32)   # (1, N): no reshape later
        return w, b

    keys = jax.random.split(key, 5 + 4 * depth)
    p = {}
    p["patch_w"], p["patch_b"] = dense(keys[0], in_patch_dim, embed_dim)
    p["cls_token"] = 0.02 * jax.random.normal(keys[1], (1, embed_dim), jnp.float32)
    p["dist_token"] = 0.02 * jax.random.normal(keys[2], (1, embed_dim), jnp.float32)
    p["pos_embed"] = 0.02 * jax.random.normal(keys[3], (num_tokens, embed_dim),
                                              jnp.float32)

    qkv_w, qkv_b, proj_w, proj_b = [], [], [], []
    fc1_w, fc1_b, fc2_w, fc2_b = [], [], [], []
    for d in range(depth):
        k0, k1, k2, k3 = keys[4 + 4 * d: 4 + 4 * d + 4]
        w, b = dense(k0, embed_dim, 3 * embed_dim); qkv_w.append(w); qkv_b.append(b)
        w, b = dense(k1, embed_dim, embed_dim);     proj_w.append(w); proj_b.append(b)
        w, b = dense(k2, embed_dim, mlp_dim);       fc1_w.append(w); fc1_b.append(b)
        w, b = dense(k3, mlp_dim, embed_dim);       fc2_w.append(w); fc2_b.append(b)
    p["qkv_w"] = jnp.stack(qkv_w);  p["qkv_b"] = jnp.stack(qkv_b)
    p["proj_w"] = jnp.stack(proj_w); p["proj_b"] = jnp.stack(proj_b)
    p["fc1_w"] = jnp.stack(fc1_w);  p["fc1_b"] = jnp.stack(fc1_b)
    p["fc2_w"] = jnp.stack(fc2_w);  p["fc2_b"] = jnp.stack(fc2_b)
    p["ln1_g"] = jnp.ones((depth, 1, embed_dim), jnp.float32)
    p["ln1_b"] = jnp.zeros((depth, 1, embed_dim), jnp.float32)
    p["ln2_g"] = jnp.ones((depth, 1, embed_dim), jnp.float32)
    p["ln2_b"] = jnp.zeros((depth, 1, embed_dim), jnp.float32)
    p["norm_g"] = jnp.ones((1, embed_dim), jnp.float32)
    p["norm_b"] = jnp.zeros((1, embed_dim), jnp.float32)
    p["head_ln_g"] = jnp.ones((1, embed_dim), jnp.float32)
    p["head_ln_b"] = jnp.zeros((1, embed_dim), jnp.float32)
    p["head_w"], p["head_b"] = dense(keys[4 + 4 * depth], embed_dim, label_dim)
    return p


# ----------------------------------------------------------------------------
# AST forward wrapper (patch extraction + one fused pallas_call)
# ----------------------------------------------------------------------------
def _extract_patches(x4, ph, pw, sh, sw):
    # x4: (B, 1, H, W) NCHW  ->  (B, P, C*ph*pw)
    patches = jax.lax.conv_general_dilated_patches(
        x4, filter_shape=(ph, pw), window_strides=(sh, sw), padding="VALID",
        dimension_numbers=("NCHW", "OIHW", "NCHW"))      # (B, C*ph*pw, nh, nw)
    B, Kf = patches.shape[0], patches.shape[1]
    P = patches.shape[2] * patches.shape[3]
    return patches.reshape(B, Kf, P).transpose(0, 2, 1)  # (B, P, K)


def ast_forward(params, x, *, patch=8, stride=8, num_heads=4, eps=1e-6):
    # NOTE: eps=1e-6 matches timm ViT/AST LayerNorm (torch default is 1e-5).
    x = x.astype(jnp.float32)
    B, C, L = x.shape
    x4 = x[:, None, :, :]                                 # (B, 1, C, L)
    patches = _extract_patches(x4, patch, patch, stride, stride)   # (B, P, K)
    P, K = patches.shape[1], patches.shape[2]
    D = params["patch_w"].shape[1]
    depth = params["qkv_w"].shape[0]
    mlp = params["fc1_w"].shape[2]
    label_dim = params["head_w"].shape[1]
    T = P + 2

    # Two leading zero rows so one matmul covers all T tokens; the additive
    # base carries cls/dist tokens, patch-embed bias and positional embedding.
    patches_padded = jnp.pad(patches, ((0, 0), (2, 0), (0, 0)))    # (B, T, K)
    base = jnp.concatenate(
        [params["cls_token"], params["dist_token"],
         jnp.broadcast_to(params["patch_b"], (P, D))],
        axis=0) + params["pos_embed"]                              # (T, D)

    def rep(shape):
        return pl.BlockSpec(shape, lambda b: (0,) * len(shape))

    kern = functools.partial(_ast_fused_kernel, depth=depth,
                             num_heads=num_heads, eps=eps)

    out = pl.pallas_call(
        kern,
        grid=(B,),
        in_specs=[
            pl.BlockSpec((1, T, K), lambda b: (b, 0, 0)),          # patches
            rep((T, D)),                                            # base
            rep((K, D)),                                            # patch_w
            rep((depth, 1, D)), rep((depth, 1, D)),                 # ln1 g/b
            rep((depth, D, 3 * D)), rep((depth, 1, 3 * D)),         # qkv w/b
            rep((depth, D, D)), rep((depth, 1, D)),                 # proj w/b
            rep((depth, 1, D)), rep((depth, 1, D)),                 # ln2 g/b
            rep((depth, D, mlp)), rep((depth, 1, mlp)),             # fc1 w/b
            rep((depth, mlp, D)), rep((depth, 1, D)),               # fc2 w/b
            rep((1, D)), rep((1, D)),                               # final norm
            rep((1, D)), rep((1, D)),                               # head LN
            rep((D, label_dim)), rep((1, label_dim)),               # head w/b
        ],
        out_specs=pl.BlockSpec((1, 1, label_dim), lambda b: (b, 0, 0)),
        out_shape=jax.ShapeDtypeStruct((B, 1, label_dim), jnp.float32),
        compiler_params=pltpu.CompilerParams(
            dimension_semantics=("parallel",)),   # 2 TCs on v7x split the batch
    )(
        patches_padded, base, params["patch_w"],
        params["ln1_g"], params["ln1_b"],
        params["qkv_w"], params["qkv_b"],
        params["proj_w"], params["proj_b"],
        params["ln2_g"], params["ln2_b"],
        params["fc1_w"], params["fc1_b"],
        params["fc2_w"], params["fc2_b"],
        params["norm_g"], params["norm_b"],
        params["head_ln_g"], params["head_ln_b"],
        params["head_w"], params["head_b"],
    )
    return out[:, 0, :]                                            # (B, label_dim)


# ----------------------------------------------------------------------------
# DemucastModel.forward
# ----------------------------------------------------------------------------
def demucast_forward(params, x, *, isbaseline=True, **ast_kwargs):
    if not isbaseline:
        # TODO(synk): external Demucs pre_encoder not specified; only the
        # baseline (identity-encoder) path is implemented.
        raise NotImplementedError("non-baseline encoder path not available")
    B, C, L = x.shape            # mirrors `B, C, L = x.shape` in PyTorch forward
    return ast_forward(params, x, **ast_kwargs)


# ----------------------------------------------------------------------------
if __name__ == "__main__":
    key = jax.random.PRNGKey(0)
    kx, kp = jax.random.split(key)

    # small shapes consistent with the (B, C, L) contract of the module
    B, C, L = 2, 16, 16
    patch, stride = 8, 8
    embed_dim, depth, num_heads, label_dim = 32, 2, 4, 10

    nh = (C - patch) // stride + 1
    nw = (L - patch) // stride + 1
    num_tokens = nh * nw + 2     # + cls + dist

    x = jax.random.normal(kx, (B, C, L), jnp.float32)
    params = init_params(
        kp,
        in_patch_dim=patch * patch,
        embed_dim=embed_dim,
        depth=depth,
        mlp_dim=4 * embed_dim,
        num_tokens=num_tokens,
        label_dim=label_dim,
    )

    fwd = jax.jit(functools.partial(
        demucast_forward, isbaseline=True,
        patch=patch, stride=stride, num_heads=num_heads))

    out = jax.block_until_ready(fwd(params, x))
    assert out.shape == (B, label_dim), out.shape
    assert out.dtype == jnp.float32
    assert bool(jnp.all(jnp.isfinite(out)))
    print("KERNEL_OK")
</pallas_src>

<mosaic_0001>
module attributes {stable_mosaic.version = 11 : i64} {
  func.func @_ast_fused_kernel(%arg0: i32, %arg1: memref<1x6x64xf32, #tpu.memory_space<vmem>>, %arg2: memref<6x32xf32, #tpu.memory_space<vmem>>, %arg3: memref<64x32xf32, #tpu.memory_space<vmem>>, %arg4: memref<2x1x32xf32, #tpu.memory_space<vmem>>, %arg5: memref<2x1x32xf32, #tpu.memory_space<vmem>>, %arg6: memref<2x32x96xf32, #tpu.memory_space<vmem>>, %arg7: memref<2x1x96xf32, #tpu.memory_space<vmem>>, %arg8: memref<2x32x32xf32, #tpu.memory_space<vmem>>, %arg9: memref<2x1x32xf32, #tpu.memory_space<vmem>>, %arg10: memref<2x1x32xf32, #tpu.memory_space<vmem>>, %arg11: memref<2x1x32xf32, #tpu.memory_space<vmem>>, %arg12: memref<2x32x128xf32, #tpu.memory_space<vmem>>, %arg13: memref<2x1x128xf32, #tpu.memory_space<vmem>>, %arg14: memref<2x128x32xf32, #tpu.memory_space<vmem>>, %arg15: memref<2x1x32xf32, #tpu.memory_space<vmem>>, %arg16: memref<1x32xf32, #tpu.memory_space<vmem>>, %arg17: memref<1x32xf32, #tpu.memory_space<vmem>>, %arg18: memref<1x32xf32, #tpu.memory_space<vmem>>, %arg19: memref<1x32xf32, #tpu.memory_space<vmem>>, %arg20: memref<32x10xf32, #tpu.memory_space<vmem>>, %arg21: memref<1x10xf32, #tpu.memory_space<vmem>>, %arg22: memref<1x1x10xf32, #tpu.memory_space<vmem>>) attributes {dimension_semantics = [#tpu.dimension_semantics<parallel>], iteration_bounds = array<i64: 2>, scalar_prefetch = 0 : i64, scratch_operands = 0 : i64, tpu.core_type = #tpu.core_type<tc>, window_params = [{transform_indices = @transform_0, window_bounds = array<i64: 1, 6, 64>}, {pipeline_mode = #tpu.pipeline_mode<synchronous>, transform_indices = @transform_1, window_bounds = array<i64: 6, 32>}, {pipeline_mode = #tpu.pipeline_mode<synchronous>, transform_indices = @transform_2, window_bounds = array<i64: 64, 32>}, {pipeline_mode = #tpu.pipeline_mode<synchronous>, transform_indices = @transform_3, window_bounds = array<i64: 2, 1, 32>}, {pipeline_mode = #tpu.pipeline_mode<synchronous>, transform_indices = @transform_4, window_bounds = array<i64: 2, 1, 32>}, {pipeline_mode = #tpu.pipeline_mode<synchronous>, transform_indices = @transform_5, window_bounds = array<i64: 2, 32, 96>}, {pipeline_mode = #tpu.pipeline_mode<synchronous>, transform_indices = @transform_6, window_bounds = array<i64: 2, 1, 96>}, {pipeline_mode = #tpu.pipeline_mode<synchronous>, transform_indices = @transform_7, window_bounds = array<i64: 2, 32, 32>}, {pipeline_mode = #tpu.pipeline_mode<synchronous>, transform_indices = @transform_8, window_bounds = array<i64: 2, 1, 32>}, {pipeline_mode = #tpu.pipeline_mode<synchronous>, transform_indices = @transform_9, window_bounds = array<i64: 2, 1, 32>}, {pipeline_mode = #tpu.pipeline_mode<synchronous>, transform_indices = @transform_10, window_bounds = array<i64: 2, 1, 32>}, {pipeline_mode = #tpu.pipeline_mode<synchronous>, transform_indices = @transform_11, window_bounds = array<i64: 2, 32, 128>}, {pipeline_mode = #tpu.pipeline_mode<synchronous>, transform_indices = @transform_12, window_bounds = array<i64: 2, 1, 128>}, {pipeline_mode = #tpu.pipeline_mode<synchronous>, transform_indices = @transform_13, window_bounds = array<i64: 2, 128, 32>}, {pipeline_mode = #tpu.pipeline_mode<synchronous>, transform_indices = @transform_14, window_bounds = array<i64: 2, 1, 32>}, {pipeline_mode = #tpu.pipeline_mode<synchronous>, transform_indices = @transform_15, window_bounds = array<i64: 1, 32>}, {pipeline_mode = #tpu.pipeline_mode<synchronous>, transform_indices = @transform_16, window_bounds = array<i64: 1, 32>}, {pipeline_mode = #tpu.pipeline_mode<synchronous>, transform_indices = @transform_17, window_bounds = array<i64: 1, 32>}, {pipeline_mode = #tpu.pipeline_mode<synchronous>, transform_indices = @transform_18, window_bounds = array<i64: 1, 32>}, {pipeline_mode = #tpu.pipeline_mode<synchronous>, transform_indices = @transform_19, window_bounds = array<i64: 32, 10>}, {pipeline_mode = #tpu.pipeline_mode<synchronous>, transform_indices = @transform_20, window_bounds = array<i64: 1, 10>}, {transform_indices = @transform_21, window_bounds = array<i64: 1, 1, 10>}]} {
    %c0 = arith.constant 0 : index
    %c0_0 = arith.constant 0 : index
    %c0_1 = arith.constant 0 : index
    %0 = vector.load %arg1[%c0, %c0_0, %c0_1] : memref<1x6x64xf32, #tpu.memory_space<vmem>>, vector<1x6x64xf32>
    %1 = vector.shape_cast %0 : vector<1x6x64xf32> to vector<6x64xf32>
    %c0_2 = arith.constant 0 : index
    %c0_3 = arith.constant 0 : index
    %2 = vector.load %arg3[%c0_2, %c0_3] : memref<64x32xf32, #tpu.memory_space<vmem>>, vector<64x32xf32>
    %cst = arith.constant dense<0.000000e+00> : vector<6x32xf32>
    %3 = tpu.matmul %1, %2, %cst {dimension_numbers = #tpu.dot_dimension_numbers<[1], [0], [0], [1], [0, 0, 1, 1], [], []>} : vector<6x64xf32>, vector<64x32xf32>, vector<6x32xf32> -> vector<6x32xf32>
    %c0_4 = arith.constant 0 : index
    %c0_5 = arith.constant 0 : index
    %4 = vector.load %arg2[%c0_4, %c0_5] : memref<6x32xf32, #tpu.memory_space<vmem>>, vector<6x32xf32>
    %5 = arith.addf %3, %4 : vector<6x32xf32>
    %c0_6 = arith.constant 0 : index
    %c0_7 = arith.constant 0 : index
    %c0_8 = arith.constant 0 : index
    %6 = vector.load %arg4[%c0_6, %c0_7, %c0_8] : memref<2x1x32xf32, #tpu.memory_space<vmem>>, vector<1x1x32xf32>
    %7 = vector.shape_cast %6 : vector<1x1x32xf32> to vector<1x32xf32>
    %c0_9 = arith.constant 0 : index
    %c0_10 = arith.constant 0 : index
    %c0_11 = arith.constant 0 : index
    %8 = vector.load %arg5[%c0_9, %c0_10, %c0_11] : memref<2x1x32xf32, #tpu.memory_space<vmem>>, vector<1x1x32xf32>
    %9 = vector.shape_cast %8 : vector<1x1x32xf32> to vector<1x32xf32>
    %cst_12 = arith.constant dense<0.000000e+00> : vector<6xf32>
    %10 = vector.multi_reduction <add>, %5, %cst_12 [1] : vector<6x32xf32> to vector<6xf32>
    %11 = vector.shape_cast %10 : vector<6xf32> to vector<6x1xf32>
    %cst_13 = arith.constant 3.200000e+01 : f32
    %12 = vector.broadcast %cst_13 : f32 to vector<6x1xf32>
    %13 = arith.divf %11, %12 : vector<6x1xf32>
    %14 = vector.broadcast %13 : vector<6x1xf32> to vector<6x32xf32>
    %15 = arith.subf %5, %14 : vector<6x32xf32>
    %16 = arith.mulf %15, %15 : vector<6x32xf32>
    %cst_14 = arith.constant dense<0.000000e+00> : vector<6xf32>
    %17 = vector.multi_reduction <add>, %16, %cst_14 [1] : vector<6x32xf32> to vector<6xf32>
    %18 = vector.shape_cast %17 : vector<6xf32> to vector<6x1xf32>
    %cst_15 = arith.constant 3.200000e+01 : f32
    %19 = vector.broadcast %cst_15 : f32 to vector<6x1xf32>
    %20 = arith.divf %18, %19 : vector<6x1xf32>
    %21 = vector.broadcast %13 : vector<6x1xf32> to vector<6x32xf32>
    %22 = arith.subf %5, %21 : vector<6x32xf32>
    %cst_16 = arith.constant 9.99999997E-7 : f32
    %23 = vector.broadcast %cst_16 : f32 to vector<6x1xf32>
    %24 = arith.addf %20, %23 : vector<6x1xf32>
    %25 = math.rsqrt %24 : vector<6x1xf32>
    %26 = vector.broadcast %25 : vector<6x1xf32> to vector<6x32xf32>
    %27 = arith.mulf %22, %26 : vector<6x32xf32>
    %28 = vector.broadcast %7 : vector<1x32xf32> to vector<6x32xf32>
    %29 = arith.mulf %27, %28 : vector<6x32xf32>
    %30 = vector.broadcast %9 : vector<1x32xf32> to vector<6x32xf32>
    %31 = arith.addf %29, %30 : vector<6x32xf32>
    %c0_17 = arith.constant 0 : index
    %c0_18 = arith.constant 0 : index
    %c0_19 = arith.constant 0 : index
    %32 = vector.load %arg6[%c0_17, %c0_18, %c0_19] : memref<2x32x96xf32, #tpu.memory_space<vmem>>, vector<1x32x96xf32>
    %33 = vector.shape_cast %32 : vector<1x32x96xf32> to vector<32x96xf32>
    %cst_20 = arith.constant dense<0.000000e+00> : vector<6x96xf32>
    %34 = tpu.matmul %31, %33, %cst_20 {dimension_numbers = #tpu.dot_dimension_numbers<[1], [0], [0], [1], [0, 0, 1, 1], [], []>} : vector<6x32xf32>, vector<32x96xf32>, vector<6x96xf32> -> vector<6x96xf32>
    %c0_21 = arith.constant 0 : index
    %c0_22 = arith.constant 0 : index
    %c0_23 = arith.constant 0 : index
    %35 = vector.load %arg7[%c0_21, %c0_22, %c0_23] : memref<2x1x96xf32, #tpu.memory_space<vmem>>, vector<1x1x96xf32>
    %36 = vector.shape_cast %35 : vector<1x1x96xf32> to vector<1x96xf32>
    %37 = vector.broadcast %36 : vector<1x96xf32> to vector<6x96xf32>
    %38 = arith.addf %34, %37 : vector<6x96xf32>
    %c0_24 = arith.constant 0 : index
    %c0_25 = arith.constant 0 : index
    %c0_26 = arith.constant 0 : index
    %39 = vector.load %arg8[%c0_24, %c0_25, %c0_26] : memref<2x32x32xf32, #tpu.memory_space<vmem>>, vector<1x32x32xf32>
    %40 = vector.shape_cast %39 : vector<1x32x32xf32> to vector<32x32xf32>
    %41 = vector.extract_strided_slice %38 {offsets = [0, 0], sizes = [6, 8], strides = [1, 1]} : vector<6x96xf32> to vector<6x8xf32>
    %42 = vector.extract_strided_slice %38 {offsets = [0, 32], sizes = [6, 8], strides = [1, 1]} : vector<6x96xf32> to vector<6x8xf32>
    %43 = vector.extract_strided_slice %38 {offsets = [0, 64], sizes = [6, 8], strides = [1, 1]} : vector<6x96xf32> to vector<6x8xf32>
    %44 = tpu.transpose %42, [1, 0] : vector<6x8xf32> -> vector<8x6xf32>
    %cst_27 = arith.constant dense<0.000000e+00> : vector<6x6xf32>
    %45 = tpu.matmul %41, %44, %cst_27 {dimension_numbers = #tpu.dot_dimension_numbers<[1], [0], [0], [1], [0, 0, 1, 1], [], []>} : vector<6x8xf32>, vector<8x6xf32>, vector<6x6xf32> -> vector<6x6xf32>
    %cst_28 = arith.constant 0.353553385 : f32
    %46 = vector.broadcast %cst_28 : f32 to vector<6x6xf32>
    %47 = arith.mulf %45, %46 : vector<6x6xf32>
    %cst_29 = arith.constant dense<0xFF800000> : vector<6xf32>
    %48 = vector.multi_reduction <maximumf>, %47, %cst_29 [1] : vector<6x6xf32> to vector<6xf32>
    %49 = vector.shape_cast %48 : vector<6xf32> to vector<6x1xf32>
    %50 = vector.broadcast %49 : vector<6x1xf32> to vector<6x6xf32>
    %51 = arith.subf %47, %50 : vector<6x6xf32>
    %52 = math.exp %51 : vector<6x6xf32>
    %cst_30 = arith.constant dense<0.000000e+00> : vector<6xf32>
    %53 = vector.multi_reduction <add>, %52, %cst_30 [1] : vector<6x6xf32> to vector<6xf32>
    %54 = vector.shape_cast %53 : vector<6xf32> to vector<6x1xf32>
    %55 = tpu.reciprocal %54 {approx = true} : vector<6x1xf32> -> vector<6x1xf32>
    %56 = vector.broadcast %55 : vector<6x1xf32> to vector<6x6xf32>
    %57 = arith.mulf %52, %56 : vector<6x6xf32>
    %cst_31 = arith.constant dense<0.000000e+00> : vector<6x8xf32>
    %58 = tpu.matmul %57, %43, %cst_31 {dimension_numbers = #tpu.dot_dimension_numbers<[1], [0], [0], [1], [0, 0, 1, 1], [], []>} : vector<6x6xf32>, vector<6x8xf32>, vector<6x8xf32> -> vector<6x8xf32>
    %59 = vector.extract_strided_slice %40 {offsets = [0, 0], sizes = [8, 32], strides = [1, 1]} : vector<32x32xf32> to vector<8x32xf32>
    %cst_32 = arith.constant dense<0.000000e+00> : vector<6x32xf32>
    %60 = tpu.matmul %58, %59, %cst_32 {dimension_numbers = #tpu.dot_dimension_numbers<[1], [0], [0], [1], [0, 0, 1, 1], [], []>} : vector<6x8xf32>, vector<8x32xf32>, vector<6x32xf32> -> vector<6x32xf32>
    %61 = vector.extract_strided_slice %38 {offsets = [0, 8], sizes = [6, 8], strides = [1, 1]} : vector<6x96xf32> to vector<6x8xf32>
    %62 = vector.extract_strided_slice %38 {offsets = [0, 40], sizes = [6, 8], strides = [1, 1]} : vector<6x96xf32> to vector<6x8xf32>
    %63 = vector.extract_strided_slice %38 {offsets = [0, 72], sizes = [6, 8], strides = [1, 1]} : vector<6x96xf32> to vector<6x8xf32>
    %64 = tpu.transpose %62, [1, 0] : vector<6x8xf32> -> vector<8x6xf32>
    %cst_33 = arith.constant dense<0.000000e+00> : vector<6x6xf32>
    %65 = tpu.matmul %61, %64, %cst_33 {dimension_numbers = #tpu.dot_dimension_numbers<[1], [0], [0], [1], [0, 0, 1, 1], [], []>} : vector<6x8xf32>, vector<8x6xf32>, vector<6x6xf32> -> vector<6x6xf32>
    %cst_34 = arith.constant 0.353553385 : f32
    %66 = vector.broadcast %cst_34 : f32 to vector<6x6xf32>
    %67 = arith.mulf %65, %66 : vector<6x6xf32>
    %cst_35 = arith.constant dense<0xFF800000> : vector<6xf32>
    %68 = vector.multi_reduction <maximumf>, %67, %cst_35 [1] : vector<6x6xf32> to vector<6xf32>
    %69 = vector.shape_cast %68 : vector<6xf32> to vector<6x1xf32>
    %70 = vector.broadcast %69 : vector<6x1xf32> to vector<6x6xf32>
    %71 = arith.subf %67, %70 : vector<6x6xf32>
    %72 = math.exp %71 : vector<6x6xf32>
    %cst_36 = arith.constant dense<0.000000e+00> : vector<6xf32>
    %73 = vector.multi_reduction <add>, %72, %cst_36 [1] : vector<6x6xf32> to vector<6xf32>
    %74 = vector.shape_cast %73 : vector<6xf32> to vector<6x1xf32>
    %75 = tpu.reciprocal %74 {approx = true} : vector<6x1xf32> -> vector<6x1xf32>
    %76 = vector.broadcast %75 : vector<6x1xf32> to vector<6x6xf32>
    %77 = arith.mulf %72, %76 : vector<6x6xf32>
    %cst_37 = arith.constant dense<0.000000e+00> : vector<6x8xf32>
    %78 = tpu.matmul %77, %63, %cst_37 {dimension_numbers = #tpu.dot_dimension_numbers<[1], [0], [0], [1], [0, 0, 1, 1], [], []>} : vector<6x6xf32>, vector<6x8xf32>, vector<6x8xf32> -> vector<6x8xf32>
    %79 = vector.extract_strided_slice %40 {offsets = [8, 0], sizes = [8, 32], strides = [1, 1]} : vector<32x32xf32> to vector<8x32xf32>
    %cst_38 = arith.constant dense<0.000000e+00> : vector<6x32xf32>
    %80 = tpu.matmul %78, %79, %cst_38 {dimension_numbers = #tpu.dot_dimension_numbers<[1], [0], [0], [1], [0, 0, 1, 1], [], []>} : vector<6x8xf32>, vector<8x32xf32>, vector<6x32xf32> -> vector<6x32xf32>
    %81 = arith.addf %60, %80 : vector<6x32xf32>
    %82 = vector.extract_strided_slice %38 {offsets = [0, 16], sizes = [6, 8], strides = [1, 1]} : vector<6x96xf32> to vector<6x8xf32>
    %83 = vector.extract_strided_slice %38 {offsets = [0, 48], sizes = [6, 8], strides = [1, 1]} : vector<6x96xf32> to vector<6x8xf32>
    %84 = vector.extract_strided_slice %38 {offsets = [0, 80], sizes = [6, 8], strides = [1, 1]} : vector<6x96xf32> to vector<6x8xf32>
    %85 = tpu.transpose %83, [1, 0] : vector<6x8xf32> -> vector<8x6xf32>
    %cst_39 = arith.constant dense<0.000000e+00> : vector<6x6xf32>
    %86 = tpu.matmul %82, %85, %cst_39 {dimension_numbers = #tpu.dot_dimension_numbers<[1], [0], [0], [1], [0, 0, 1, 1], [], []>} : vector<6x8xf32>, vector<8x6xf32>, vector<6x6xf32> -> vector<6x6xf32>
    %cst_40 = arith.constant 0.353553385 : f32
    %87 = vector.broadcast %cst_40 : f32 to vector<6x6xf32>
    %88 = arith.mulf %86, %87 : vector<6x6xf32>
    %cst_41 = arith.constant dense<0xFF800000> : vector<6xf32>
    %89 = vector.multi_reduction <maximumf>, %88, %cst_41 [1] : vector<6x6xf32> to vector<6xf32>
    %90 = vector.shape_cast %89 : vector<6xf32> to vector<6x1xf32>
    %91 = vector.broadcast %90 : vector<6x1xf32> to vector<6x6xf32>
    %92 = arith.subf %88, %91 : vector<6x6xf32>
    %93 = math.exp %92 : vector<6x6xf32>
    %cst_42 = arith.constant dense<0.000000e+00> : vector<6xf32>
    %94 = vector.multi_reduction <add>, %93, %cst_42 [1] : vector<6x6xf32> to vector<6xf32>
    %95 = vector.shape_cast %94 : vector<6xf32> to vector<6x1xf32>
    %96 = tpu.reciprocal %95 {approx = true} : vector<6x1xf32> -> vector<6x1xf32>
    %97 = vector.broadcast %96 : vector<6x1xf32> to vector<6x6xf32>
    %98 = arith.mulf %93, %97 : vector<6x6xf32>
    %cst_43 = arith.constant dense<0.000000e+00> : vector<6x8xf32>
    %99 = tpu.matmul %98, %84, %cst_43 {dimension_numbers = #tpu.dot_dimension_numbers<[1], [0], [0], [1], [0, 0, 1, 1], [], []>} : vector<6x6xf32>, vector<6x8xf32>, vector<6x8xf32> -> vector<6x8xf32>
    %100 = vector.extract_strided_slice %40 {offsets = [16, 0], sizes = [8, 32], strides = [1, 1]} : vector<32x32xf32> to vector<8x32xf32>
    %cst_44 = arith.constant dense<0.000000e+00> : vector<6x32xf32>
    %101 = tpu.matmul %99, %100, %cst_44 {dimension_numbers = #tpu.dot_dimension_numbers<[1], [0], [0], [1], [0, 0, 1, 1], [], []>} : vector<6x8xf32>, vector<8x32xf32>, vector<6x32xf32> -> vector<6x32xf32>
    %102 = arith.addf %81, %101 : vector<6x32xf32>
    %103 = vector.extract_strided_slice %38 {offsets = [0, 24], sizes = [6, 8], strides = [1, 1]} : vector<6x96xf32> to vector<6x8xf32>
    %104 = vector.extract_strided_slice %38 {offsets = [0, 56], sizes = [6, 8], strides = [1, 1]} : vector<6x96xf32> to vector<6x8xf32>
    %105 = vector.extract_strided_slice %38 {offsets = [0, 88], sizes = [6, 8], strides = [1, 1]} : vector<6x96xf32> to vector<6x8xf32>
    %106 = tpu.transpose %104, [1, 0] : vector<6x8xf32> -> vector<8x6xf32>
    %cst_45 = arith.constant dense<0.000000e+00> : vector<6x6xf32>
    %107 = tpu.matmul %103, %106, %cst_45 {dimension_numbers = #tpu.dot_dimension_numbers<[1], [0], [0], [1], [0, 0, 1, 1], [], []>} : vector<6x8xf32>, vector<8x6xf32>, vector<6x6xf32> -> vector<6x6xf32>
    %cst_46 = arith.constant 0.353553385 : f32
    %108 = vector.broadcast %cst_46 : f32 to vector<6x6xf32>
    %109 = arith.mulf %107, %108 : vector<6x6xf32>
    %cst_47 = arith.constant dense<0xFF800000> : vector<6xf32>
    %110 = vector.multi_reduction <maximumf>, %109, %cst_47 [1] : vector<6x6xf32> to vector<6xf32>
    %111 = vector.shape_cast %110 : vector<6xf32> to vector<6x1xf32>
    %112 = vector.broadcast %111 : vector<6x1xf32> to vector<6x6xf32>
    %113 = arith.subf %109, %112 : vector<6x6xf32>
    %114 = math.exp %113 : vector<6x6xf32>
    %cst_48 = arith.constant dense<0.000000e+00> : vector<6xf32>
    %115 = vector.multi_reduction <add>, %114, %cst_48 [1] : vector<6x6xf32> to vector<6xf32>
    %116 = vector.shape_cast %115 : vector<6xf32> to vector<6x1xf32>
    %117 = tpu.reciprocal %116 {approx = true} : vector<6x1xf32> -> vector<6x1xf32>
    %118 = vector.broadcast %117 : vector<6x1xf32> to vector<6x6xf32>
    %119 = arith.mulf %114, %118 : vector<6x6xf32>
    %cst_49 = arith.constant dense<0.000000e+00> : vector<6x8xf32>
    %120 = tpu.matmul %119, %105, %cst_49 {dimension_numbers = #tpu.dot_dimension_numbers<[1], [0], [0], [1], [0, 0, 1, 1], [], []>} : vector<6x6xf32>, vector<6x8xf32>, vector<6x8xf32> -> vector<6x8xf32>
    %121 = vector.extract_strided_slice %40 {offsets = [24, 0], sizes = [8, 32], strides = [1, 1]} : vector<32x32xf32> to vector<8x32xf32>
    %cst_50 = arith.constant dense<0.000000e+00> : vector<6x32xf32>
    %122 = tpu.matmul %120, %121, %cst_50 {dimension_numbers = #tpu.dot_dimension_numbers<[1], [0], [0], [1], [0, 0, 1, 1], [], []>} : vector<6x8xf32>, vector<8x32xf32>, vector<6x32xf32> -> vector<6x32xf32>
    %123 = arith.addf %102, %122 : vector<6x32xf32>
    %124 = arith.addf %5, %123 : vector<6x32xf32>
    %c0_51 = arith.constant 0 : index
    %c0_52 = arith.constant 0 : index
    %c0_53 = arith.constant 0 : index
    %125 = vector.load %arg9[%c0_51, %c0_52, %c0_53] : memref<2x1x32xf32, #tpu.memory_space<vmem>>, vector<1x1x32xf32>
    %126 = vector.shape_cast %125 : vector<1x1x32xf32> to vector<1x32xf32>
    %127 = vector.broadcast %126 : vector<1x32xf32> to vector<6x32xf32>
    %128 = arith.addf %124, %127 : vector<6x32xf32>
    %c0_54 = arith.constant 0 : index
    %c0_55 = arith.constant 0 : index
    %c0_56 = arith.constant 0 : index
    %129 = vector.load %arg10[%c0_54, %c0_55, %c0_56] : memref<2x1x32xf32, #tpu.memory_space<vmem>>, vector<1x1x32xf32>
    %130 = vector.shape_cast %129 : vector<1x1x32xf32> to vector<1x32xf32>
    %c0_57 = arith.constant 0 : index
    %c0_58 = arith.constant 0 : index
    %c0_59 = arith.constant 0 : index
    %131 = vector.load %arg11[%c0_57, %c0_58, %c0_59] : memref<2x1x32xf32, #tpu.memory_space<vmem>>, vector<1x1x32xf32>
    %132 = vector.shape_cast %131 : vector<1x1x32xf32> to vector<1x32xf32>
    %cst_60 = arith.constant dense<0.000000e+00> : vector<6xf32>
    %133 = vector.multi_reduction <add>, %128, %cst_60 [1] : vector<6x32xf32> to vector<6xf32>
    %134 = vector.shape_cast %133 : vector<6xf32> to vector<6x1xf32>
    %cst_61 = arith.constant 3.200000e+01 : f32
    %135 = vector.broadcast %cst_61 : f32 to vector<6x1xf32>
    %136 = arith.divf %134, %135 : vector<6x1xf32>
    %137 = vector.broadcast %136 : vector<6x1xf32> to vector<6x32xf32>
    %138 = arith.subf %128, %137 : vector<6x32xf32>
    %139 = arith.mulf %138, %138 : vector<6x32xf32>
    %cst_62 = arith.constant dense<0.000000e+00> : vector<6xf32>
    %140 = vector.multi_reduction <add>, %139, %cst_62 [1] : vector<6x32xf32> to vector<6xf32>
    %141 = vector.shape_cast %140 : vector<6xf32> to vector<6x1xf32>
    %cst_63 = arith.constant 3.200000e+01 : f32
    %142 = vector.broadcast %cst_63 : f32 to vector<6x1xf32>
    %143 = arith.divf %141, %142 : vector<6x1xf32>
    %144 = vector.broadcast %136 : vector<6x1xf32> to vector<6x32xf32>
    %145 = arith.subf %128, %144 : vector<6x32xf32>
    %cst_64 = arith.constant 9.99999997E-7 : f32
    %146 = vector.broadcast %cst_64 : f32 to vector<6x1xf32>
    %147 = arith.addf %143, %146 : vector<6x1xf32>
    %148 = math.rsqrt %147 : vector<6x1xf32>
    %149 = vector.broadcast %148 : vector<6x1xf32> to vector<6x32xf32>
    %150 = arith.mulf %145, %149 : vector<6x32xf32>
    %151 = vector.broadcast %130 : vector<1x32xf32> to vector<6x32xf32>
    %152 = arith.mulf %150, %151 : vector<6x32xf32>
    %153 = vector.broadcast %132 : vector<1x32xf32> to vector<6x32xf32>
    %154 = arith.addf %152, %153 : vector<6x32xf32>
    %c0_65 = arith.constant 0 : index
    %c0_66 = arith.constant 0 : index
    %c0_67 = arith.constant 0 : index
    %155 = vector.load %arg12[%c0_65, %c0_66, %c0_67] : memref<2x32x128xf32, #tpu.memory_space<vmem>>, vector<1x32x128xf32>
    %156 = vector.shape_cast %155 : vector<1x32x128xf32> to vector<32x128xf32>
    %cst_68 = arith.constant dense<0.000000e+00> : vector<6x128xf32>
    %157 = tpu.matmul %154, %156, %cst_68 {dimension_numbers = #tpu.dot_dimension_numbers<[1], [0], [0], [1], [0, 0, 1, 1], [], []>} : vector<6x32xf32>, vector<32x128xf32>, vector<6x128xf32> -> vector<6x128xf32>
    %c0_69 = arith.constant 0 : index
    %c0_70 = arith.constant 0 : index
    %c0_71 = arith.constant 0 : index
    %158 = vector.load %arg13[%c0_69, %c0_70, %c0_71] : memref<2x1x128xf32, #tpu.memory_space<vmem>>, vector<1x1x128xf32>
    %159 = vector.shape_cast %158 : vector<1x1x128xf32> to vector<1x128xf32>
    %160 = vector.broadcast %159 : vector<1x128xf32> to vector<6x128xf32>
    %161 = arith.addf %157, %160 : vector<6x128xf32>
    %162 = arith.mulf %161, %161 : vector<6x128xf32>
    %163 = arith.mulf %161, %162 : vector<6x128xf32>
    %cst_72 = arith.constant 4.471500e-02 : f32
    %164 = vector.broadcast %cst_72 : f32 to vector<6x128xf32>
    %165 = arith.mulf %164, %163 : vector<6x128xf32>
    %166 = arith.addf %161, %165 : vector<6x128xf32>
    %cst_73 = arith.constant 0.797884583 : f32
    %167 = vector.broadcast %cst_73 : f32 to vector<6x128xf32>
    %168 = arith.mulf %167, %166 : vector<6x128xf32>
    %169 = math.tanh %168 : vector<6x128xf32>
    %cst_74 = arith.constant 1.000000e+00 : f32
    %170 = vector.broadcast %cst_74 : f32 to vector<6x128xf32>
    %171 = arith.addf %170, %169 : vector<6x128xf32>
    %cst_75 = arith.constant 5.000000e-01 : f32
    %172 = vector.broadcast %cst_75 : f32 to vector<6x128xf32>
    %173 = arith.mulf %172, %171 : vector<6x128xf32>
    %174 = arith.mulf %161, %173 : vector<6x128xf32>
    %c0_76 = arith.constant 0 : index
    %c0_77 = arith.constant 0 : index
    %c0_78 = arith.constant 0 : index
    %175 = vector.load %arg14[%c0_76, %c0_77, %c0_78] : memref<2x128x32xf32, #tpu.memory_space<vmem>>, vector<1x128x32xf32>
    %176 = vector.shape_cast %175 : vector<1x128x32xf32> to vector<128x32xf32>
    %cst_79 = arith.constant dense<0.000000e+00> : vector<6x32xf32>
    %177 = tpu.matmul %174, %176, %cst_79 {dimension_numbers = #tpu.dot_dimension_numbers<[1], [0], [0], [1], [0, 0, 1, 1], [], []>} : vector<6x128xf32>, vector<128x32xf32>, vector<6x32xf32> -> vector<6x32xf32>
    %c0_80 = arith.constant 0 : index
    %c0_81 = arith.constant 0 : index
    %c0_82 = arith.constant 0 : index
    %178 = vector.load %arg15[%c0_80, %c0_81, %c0_82] : memref<2x1x32xf32, #tpu.memory_space<vmem>>, vector<1x1x32xf32>
    %179 = vector.shape_cast %178 : vector<1x1x32xf32> to vector<1x32xf32>
    %180 = vector.broadcast %179 : vector<1x32xf32> to vector<6x32xf32>
    %181 = arith.addf %177, %180 : vector<6x32xf32>
    %182 = arith.addf %128, %181 : vector<6x32xf32>
    %c1 = arith.constant 1 : index
    %c0_83 = arith.constant 0 : index
    %c0_84 = arith.constant 0 : index
    %183 = vector.load %arg4[%c1, %c0_83, %c0_84] : memref<2x1x32xf32, #tpu.memory_space<vmem>>, vector<1x1x32xf32>
    %184 = vector.shape_cast %183 : vector<1x1x32xf32> to vector<1x32xf32>
    %c1_85 = arith.constant 1 : index
    %c0_86 = arith.constant 0 : index
    %c0_87 = arith.constant 0 : index
    %185 = vector.load %arg5[%c1_85, %c0_86, %c0_87] : memref<2x1x32xf32, #tpu.memory_space<vmem>>, vector<1x1x32xf32>
    %186 = vector.shape_cast %185 : vector<1x1x32xf32> to vector<1x32xf32>
    %cst_88 = arith.constant dense<0.000000e+00> : vector<6xf32>
    %187 = vector.multi_reduction <add>, %182, %cst_88 [1] : vector<6x32xf32> to vector<6xf32>
    %188 = vector.shape_cast %187 : vector<6xf32> to vector<6x1xf32>
    %cst_89 = arith.constant 3.200000e+01 : f32
    %189 = vector.broadcast %cst_89 : f32 to vector<6x1xf32>
    %190 = arith.divf %188, %189 : vector<6x1xf32>
    %191 = vector.broadcast %190 : vector<6x1xf32> to vector<6x32xf32>
    %192 = arith.subf %182, %191 : vector<6x32xf32>
    %193 = arith.mulf %192, %192 : vector<6x32xf32>
    %cst_90 = arith.constant dense<0.000000e+00> : vector<6xf32>
    %194 = vector.multi_reduction <add>, %193, %cst_90 [1] : vector<6x32xf32> to vector<6xf32>
    %195 = vector.shape_cast %194 : vector<6xf32> to vector<6x1xf32>
    %cst_91 = arith.constant 3.200000e+01 : f32
    %196 = vector.broadcast %cst_91 : f32 to vector<6x1xf32>
    %197 = arith.divf %195, %196 : vector<6x1xf32>
    %198 = vector.broadcast %190 : vector<6x1xf32> to vector<6x32xf32>
    %199 = arith.subf %182, %198 : vector<6x32xf32>
    %cst_92 = arith.constant 9.99999997E-7 : f32
    %200 = vector.broadcast %cst_92 : f32 to vector<6x1xf32>
    %201 = arith.addf %197, %200 : vector<6x1xf32>
    %202 = math.rsqrt %201 : vector<6x1xf32>
    %203 = vector.broadcast %202 : vector<6x1xf32> to vector<6x32xf32>
    %204 = arith.mulf %199, %203 : vector<6x32xf32>
    %205 = vector.broadcast %184 : vector<1x32xf32> to vector<6x32xf32>
    %206 = arith.mulf %204, %205 : vector<6x32xf32>
    %207 = vector.broadcast %186 : vector<1x32xf32> to vector<6x32xf32>
    %208 = arith.addf %206, %207 : vector<6x32xf32>
    %c1_93 = arith.constant 1 : index
    %c0_94 = arith.constant 0 : index
    %c0_95 = arith.constant 0 : index
    %209 = vector.load %arg6[%c1_93, %c0_94, %c0_95] : memref<2x32x96xf32, #tpu.memory_space<vmem>>, vector<1x32x96xf32>
    %210 = vector.shape_cast %209 : vector<1x32x96xf32> to vector<32x96xf32>
    %cst_96 = arith.constant dense<0.000000e+00> : vector<6x96xf32>
    %211 = tpu.matmul %208, %210, %cst_96 {dimension_numbers = #tpu.dot_dimension_numbers<[1], [0], [0], [1], [0, 0, 1, 1], [], []>} : vector<6x32xf32>, vector<32x96xf32>, vector<6x96xf32> -> vector<6x96xf32>
    %c1_97 = arith.constant 1 : index
    %c0_98 = arith.constant 0 : index
    %c0_99 = arith.constant 0 : index
    %212 = vector.load %arg7[%c1_97, %c0_98, %c0_99] : memref<2x1x96xf32, #tpu.memory_space<vmem>>, vector<1x1x96xf32>
    %213 = vector.shape_cast %212 : vector<1x1x96xf32> to vector<1x96xf32>
    %214 = vector.broadcast %213 : vector<1x96xf32> to vector<6x96xf32>
    %215 = arith.addf %211, %214 : vector<6x96xf32>
    %c1_100 = arith.constant 1 : index
    %c0_101 = arith.constant 0 : index
    %c0_102 = arith.constant 0 : index
    %216 = vector.load %arg8[%c1_100, %c0_101, %c0_102] : memref<2x32x32xf32, #tpu.memory_space<vmem>>, vector<1x32x32xf32>
    %217 = vector.shape_cast %216 : vector<1x32x32xf32> to vector<32x32xf32>
    %218 = vector.extract_strided_slice %215 {offsets = [0, 0], sizes = [6, 8], strides = [1, 1]} : vector<6x96xf32> to vector<6x8xf32>
    %219 = vector.extract_strided_slice %215 {offsets = [0, 32], sizes = [6, 8], strides = [1, 1]} : vector<6x96xf32> to vector<6x8xf32>
    %220 = vector.extract_strided_slice %215 {offsets = [0, 64], sizes = [6, 8], strides = [1, 1]} : vector<6x96xf32> to vector<6x8xf32>
    %221 = tpu.transpose %219, [1, 0] : vector<6x8xf32> -> vector<8x6xf32>
    %cst_103 = arith.constant dense<0.000000e+00> : vector<6x6xf32>
    %222 = tpu.matmul %218, %221, %cst_103 {dimension_numbers = #tpu.dot_dimension_numbers<[1], [0], [0], [1], [0, 0, 1, 1], [], []>} : vector<6x8xf32>, vector<8x6xf32>, vector<6x6xf32> -> vector<6x6xf32>
    %cst_104 = arith.constant 0.353553385 : f32
    %223 = vector.broadcast %cst_104 : f32 to vector<6x6xf32>
    %224 = arith.mulf %222, %223 : vector<6x6xf32>
    %cst_105 = arith.constant dense<0xFF800000> : vector<6xf32>
    %225 = vector.multi_reduction <maximumf>, %224, %cst_105 [1] : vector<6x6xf32> to vector<6xf32>
    %226 = vector.shape_cast %225 : vector<6xf32> to vector<6x1xf32>
    %227 = vector.broadcast %226 : vector<6x1xf32> to vector<6x6xf32>
    %228 = arith.subf %224, %227 : vector<6x6xf32>
    %229 = math.exp %228 : vector<6x6xf32>
    %cst_106 = arith.constant dense<0.000000e+00> : vector<6xf32>
    %230 = vector.multi_reduction <add>, %229, %cst_106 [1] : vector<6x6xf32> to vector<6xf32>
    %231 = vector.shape_cast %230 : vector<6xf32> to vector<6x1xf32>
    %232 = tpu.reciprocal %231 {approx = true} : vector<6x1xf32> -> vector<6x1xf32>
    %233 = vector.broadcast %232 : vector<6x1xf32> to vector<6x6xf32>
    %234 = arith.mulf %229, %233 : vector<6x6xf32>
    %cst_107 = arith.constant dense<0.000000e+00> : vector<6x8xf32>
    %235 = tpu.matmul %234, %220, %cst_107 {dimension_numbers = #tpu.dot_dimension_numbers<[1], [0], [0], [1], [0, 0, 1, 1], [], []>} : vector<6x6xf32>, vector<6x8xf32>, vector<6x8xf32> -> vector<6x8xf32>
    %236 = vector.extract_strided_slice %217 {offsets = [0, 0], sizes = [8, 32], strides = [1, 1]} : vector<32x32xf32> to vector<8x32xf32>
    %cst_108 = arith.constant dense<0.000000e+00> : vector<6x32xf32>
    %237 = tpu.matmul %235, %236, %cst_108 {dimension_numbers = #tpu.dot_dimension_numbers<[1], [0], [0], [1], [0, 0, 1, 1], [], []>} : vector<6x8xf32>, vector<8x32xf32>, vector<6x32xf32> -> vector<6x32xf32>
    %238 = vector.extract_strided_slice %215 {offsets = [0, 8], sizes = [6, 8], strides = [1, 1]} : vector<6x96xf32> to vector<6x8xf32>
    %239 = vector.extract_strided_slice %215 {offsets = [0, 40], sizes = [6, 8], strides = [1, 1]} : vector<6x96xf32> to vector<6x8xf32>
    %240 = vector.extract_strided_slice %215 {offsets = [0, 72], sizes = [6, 8], strides = [1, 1]} : vector<6x96xf32> to vector<6x8xf32>
    %241 = tpu.transpose %239, [1, 0] : vector<6x8xf32> -> vector<8x6xf32>
    %cst_109 = arith.constant dense<0.000000e+00> : vector<6x6xf32>
    %242 = tpu.matmul %238, %241, %cst_109 {dimension_numbers = #tpu.dot_dimension_numbers<[1], [0], [0], [1], [0, 0, 1, 1], [], []>} : vector<6x8xf32>, vector<8x6xf32>, vector<6x6xf32> -> vector<6x6xf32>
    %cst_110 = arith.constant 0.353553385 : f32
    %243 = vector.broadcast %cst_110 : f32 to vector<6x6xf32>
    %244 = arith.mulf %242, %243 : vector<6x6xf32>
    %cst_111 = arith.constant dense<0xFF800000> : vector<6xf32>
    %245 = vector.multi_reduction <maximumf>, %244, %cst_111 [1] : vector<6x6xf32> to vector<6xf32>
    %246 = vector.shape_cast %245 : vector<6xf32> to vector<6x1xf32>
    %247 = vector.broadcast %246 : vector<6x1xf32> to vector<6x6xf32>
    %248 = arith.subf %244, %247 : vector<6x6xf32>
    %249 = math.exp %248 : vector<6x6xf32>
    %cst_112 = arith.constant dense<0.000000e+00> : vector<6xf32>
    %250 = vector.multi_reduction <add>, %249, %cst_112 [1] : vector<6x6xf32> to vector<6xf32>
    %251 = vector.shape_cast %250 : vector<6xf32> to vector<6x1xf32>
    %252 = tpu.reciprocal %251 {approx = true} : vector<6x1xf32> -> vector<6x1xf32>
    %253 = vector.broadcast %252 : vector<6x1xf32> to vector<6x6xf32>
    %254 = arith.mulf %249, %253 : vector<6x6xf32>
    %cst_113 = arith.constant dense<0.000000e+00> : vector<6x8xf32>
    %255 = tpu.matmul %254, %240, %cst_113 {dimension_numbers = #tpu.dot_dimension_numbers<[1], [0], [0], [1], [0, 0, 1, 1], [], []>} : vector<6x6xf32>, vector<6x8xf32>, vector<6x8xf32> -> vector<6x8xf32>
    %256 = vector.extract_strided_slice %217 {offsets = [8, 0], sizes = [8, 32], strides = [1, 1]} : vector<32x32xf32> to vector<8x32xf32>
    %cst_114 = arith.constant dense<0.000000e+00> : vector<6x32xf32>
    %257 = tpu.matmul %255, %256, %cst_114 {dimension_numbers = #tpu.dot_dimension_numbers<[1], [0], [0], [1], [0, 0, 1, 1], [], []>} : vector<6x8xf32>, vector<8x32xf32>, vector<6x32xf32> -> vector<6x32xf32>
    %258 = arith.addf %237, %257 : vector<6x32xf32>
    %259 = vector.extract_strided_slice %215 {offsets = [0, 16], sizes = [6, 8], strides = [1, 1]} : vector<6x96xf32> to vector<6x8xf32>
    %260 = vector.extract_strided_slice %215 {offsets = [0, 48], sizes = [6, 8], strides = [1, 1]} : vector<6x96xf32> to vector<6x8xf32>
    %261 = vector.extract_strided_slice %215 {offsets = [0, 80], sizes = [6, 8], strides = [1, 1]} : vector<6x96xf32> to vector<6x8xf32>
    %262 = tpu.transpose %260, [1, 0] : vector<6x8xf32> -> vector<8x6xf32>
    %cst_115 = arith.constant dense<0.000000e+00> : vector<6x6xf32>
    %263 = tpu.matmul %259, %262, %cst_115 {dimension_numbers = #tpu.dot_dimension_numbers<[1], [0], [0], [1], [0, 0, 1, 1], [], []>} : vector<6x8xf32>, vector<8x6xf32>, vector<6x6xf32> -> vector<6x6xf32>
    %cst_116 = arith.constant 0.353553385 : f32
    %264 = vector.broadcast %cst_116 : f32 to vector<6x6xf32>
    %265 = arith.mulf %263, %264 : vector<6x6xf32>
    %cst_117 = arith.constant dense<0xFF800000> : vector<6xf32>
    %266 = vector.multi_reduction <maximumf>, %265, %cst_117 [1] : vector<6x6xf32> to vector<6xf32>
    %267 = vector.shape_cast %266 : vector<6xf32> to vector<6x1xf32>
    %268 = vector.broadcast %267 : vector<6x1xf32> to vector<6x6xf32>
    %269 = arith.subf %265, %268 : vector<6x6xf32>
    %270 = math.exp %269 : vector<6x6xf32>
    %cst_118 = arith.constant dense<0.000000e+00> : vector<6xf32>
    %271 = vector.multi_reduction <add>, %270, %cst_118 [1] : vector<6x6xf32> to vector<6xf32>
    %272 = vector.shape_cast %271 : vector<6xf32> to vector<6x1xf32>
    %273 = tpu.reciprocal %272 {approx = true} : vector<6x1xf32> -> vector<6x1xf32>
    %274 = vector.broadcast %273 : vector<6x1xf32> to vector<6x6xf32>
    %275 = arith.mulf %270, %274 : vector<6x6xf32>
    %cst_119 = arith.constant dense<0.000000e+00> : vector<6x8xf32>
    %276 = tpu.matmul %275, %261, %cst_119 {dimension_numbers = #tpu.dot_dimension_numbers<[1], [0], [0], [1], [0, 0, 1, 1], [], []>} : vector<6x6xf32>, vector<6x8xf32>, vector<6x8xf32> -> vector<6x8xf32>
    %277 = vector.extract_strided_slice %217 {offsets = [16, 0], sizes = [8, 32], strides = [1, 1]} : vector<32x32xf32> to vector<8x32xf32>
    %cst_120 = arith.constant dense<0.000000e+00> : vector<6x32xf32>
    %278 = tpu.matmul %276, %277, %cst_120 {dimension_numbers = #tpu.dot_dimension_numbers<[1], [0], [0], [1], [0, 0, 1, 1], [], []>} : vector<6x8xf32>, vector<8x32xf32>, vector<6x32xf32> -> vector<6x32xf32>
    %279 = arith.addf %258, %278 : vector<6x32xf32>
    %280 = vector.extract_strided_slice %215 {offsets = [0, 24], sizes = [6, 8], strides = [1, 1]} : vector<6x96xf32> to vector<6x8xf32>
    %281 = vector.extract_strided_slice %215 {offsets = [0, 56], sizes = [6, 8], strides = [1, 1]} : vector<6x96xf32> to vector<6x8xf32>
    %282 = vector.extract_strided_slice %215 {offsets = [0, 88], sizes = [6, 8], strides = [1, 1]} : vector<6x96xf32> to vector<6x8xf32>
    %283 = tpu.transpose %281, [1, 0] : vector<6x8xf32> -> vector<8x6xf32>
    %cst_121 = arith.constant dense<0.000000e+00> : vector<6x6xf32>
    %284 = tpu.matmul %280, %283, %cst_121 {dimension_numbers = #tpu.dot_dimension_numbers<[1], [0], [0], [1], [0, 0, 1, 1], [], []>} : vector<6x8xf32>, vector<8x6xf32>, vector<6x6xf32> -> vector<6x6xf32>
    %cst_122 = arith.constant 0.353553385 : f32
    %285 = vector.broadcast %cst_122 : f32 to vector<6x6xf32>
    %286 = arith.mulf %284, %285 : vector<6x6xf32>
    %cst_123 = arith.constant dense<0xFF800000> : vector<6xf32>
    %287 = vector.multi_reduction <maximumf>, %286, %cst_123 [1] : vector<6x6xf32> to vector<6xf32>
    %288 = vector.shape_cast %287 : vector<6xf32> to vector<6x1xf32>
    %289 = vector.broadcast %288 : vector<6x1xf32> to vector<6x6xf32>
    %290 = arith.subf %286, %289 : vector<6x6xf32>
    %291 = math.exp %290 : vector<6x6xf32>
    %cst_124 = arith.constant dense<0.000000e+00> : vector<6xf32>
    %292 = vector.multi_reduction <add>, %291, %cst_124 [1] : vector<6x6xf32> to vector<6xf32>
    %293 = vector.shape_cast %292 : vector<6xf32> to vector<6x1xf32>
    %294 = tpu.reciprocal %293 {approx = true} : vector<6x1xf32> -> vector<6x1xf32>
    %295 = vector.broadcast %294 : vector<6x1xf32> to vector<6x6xf32>
    %296 = arith.mulf %291, %295 : vector<6x6xf32>
    %cst_125 = arith.constant dense<0.000000e+00> : vector<6x8xf32>
    %297 = tpu.matmul %296, %282, %cst_125 {dimension_numbers = #tpu.dot_dimension_numbers<[1], [0], [0], [1], [0, 0, 1, 1], [], []>} : vector<6x6xf32>, vector<6x8xf32>, vector<6x8xf32> -> vector<6x8xf32>
    %298 = vector.extract_strided_slice %217 {offsets = [24, 0], sizes = [8, 32], strides = [1, 1]} : vector<32x32xf32> to vector<8x32xf32>
    %cst_126 = arith.constant dense<0.000000e+00> : vector<6x32xf32>
    %299 = tpu.matmul %297, %298, %cst_126 {dimension_numbers = #tpu.dot_dimension_numbers<[1], [0], [0], [1], [0, 0, 1, 1], [], []>} : vector<6x8xf32>, vector<8x32xf32>, vector<6x32xf32> -> vector<6x32xf32>
    %300 = arith.addf %279, %299 : vector<6x32xf32>
    %301 = arith.addf %182, %300 : vector<6x32xf32>
    %c1_127 = arith.constant 1 : index
    %c0_128 = arith.constant 0 : index
    %c0_129 = arith.constant 0 : index
    %302 = vector.load %arg9[%c1_127, %c0_128, %c0_129] : memref<2x1x32xf32, #tpu.memory_space<vmem>>, vector<1x1x32xf32>
    %303 = vector.shape_cast %302 : vector<1x1x32xf32> to vector<1x32xf32>
    %304 = vector.broadcast %303 : vector<1x32xf32> to vector<6x32xf32>
    %305 = arith.addf %301, %304 : vector<6x32xf32>
    %c1_130 = arith.constant 1 : index
    %c0_131 = arith.constant 0 : index
    %c0_132 = arith.constant 0 : index
    %306 = vector.load %arg10[%c1_130, %c0_131, %c0_132] : memref<2x1x32xf32, #tpu.memory_space<vmem>>, vector<1x1x32xf32>
    %307 = vector.shape_cast %306 : vector<1x1x32xf32> to vector<1x32xf32>
    %c1_133 = arith.constant 1 : index
    %c0_134 = arith.constant 0 : index
    %c0_135 = arith.constant 0 : index
    %308 = vector.load %arg11[%c1_133, %c0_134, %c0_135] : memref<2x1x32xf32, #tpu.memory_space<vmem>>, vector<1x1x32xf32>
    %309 = vector.shape_cast %308 : vector<1x1x32xf32> to vector<1x32xf32>
    %cst_136 = arith.constant dense<0.000000e+00> : vector<6xf32>
    %310 = vector.multi_reduction <add>, %305, %cst_136 [1] : vector<6x32xf32> to vector<6xf32>
    %311 = vector.shape_cast %310 : vector<6xf32> to vector<6x1xf32>
    %cst_137 = arith.constant 3.200000e+01 : f32
    %312 = vector.broadcast %cst_137 : f32 to vector<6x1xf32>
    %313 = arith.divf %311, %312 : vector<6x1xf32>
    %314 = vector.broadcast %313 : vector<6x1xf32> to vector<6x32xf32>
    %315 = arith.subf %305, %314 : vector<6x32xf32>
    %316 = arith.mulf %315, %315 : vector<6x32xf32>
    %cst_138 = arith.constant dense<0.000000e+00> : vector<6xf32>
    %317 = vector.multi_reduction <add>, %316, %cst_138 [1] : vector<6x32xf32> to vector<6xf32>
    %318 = vector.shape_cast %317 : vector<6xf32> to vector<6x1xf32>
    %cst_139 = arith.constant 3.200000e+01 : f32
    %319 = vector.broadcast %cst_139 : f32 to vector<6x1xf32>
    %320 = arith.divf %318, %319 : vector<6x1xf32>
    %321 = vector.broadcast %313 : vector<6x1xf32> to vector<6x32xf32>
    %322 = arith.subf %305, %321 : vector<6x32xf32>
    %cst_140 = arith.constant 9.99999997E-7 : f32
    %323 = vector.broadcast %cst_140 : f32 to vector<6x1xf32>
    %324 = arith.addf %320, %323 : vector<6x1xf32>
    %325 = math.rsqrt %324 : vector<6x1xf32>
    %326 = vector.broadcast %325 : vector<6x1xf32> to vector<6x32xf32>
    %327 = arith.mulf %322, %326 : vector<6x32xf32>
    %328 = vector.broadcast %307 : vector<1x32xf32> to vector<6x32xf32>
    %329 = arith.mulf %327, %328 : vector<6x32xf32>
    %330 = vector.broadcast %309 : vector<1x32xf32> to vector<6x32xf32>
    %331 = arith.addf %329, %330 : vector<6x32xf32>
    %c1_141 = arith.constant 1 : index
    %c0_142 = arith.constant 0 : index
    %c0_143 = arith.constant 0 : index
    %332 = vector.load %arg12[%c1_141, %c0_142, %c0_143] : memref<2x32x128xf32, #tpu.memory_space<vmem>>, vector<1x32x128xf32>
    %333 = vector.shape_cast %332 : vector<1x32x128xf32> to vector<32x128xf32>
    %cst_144 = arith.constant dense<0.000000e+00> : vector<6x128xf32>
    %334 = tpu.matmul %331, %333, %cst_144 {dimension_numbers = #tpu.dot_dimension_numbers<[1], [0], [0], [1], [0, 0, 1, 1], [], []>} : vector<6x32xf32>, vector<32x128xf32>, vector<6x128xf32> -> vector<6x128xf32>
    %c1_145 = arith.constant 1 : index
    %c0_146 = arith.constant 0 : index
    %c0_147 = arith.constant 0 : index
    %335 = vector.load %arg13[%c1_145, %c0_146, %c0_147] : memref<2x1x128xf32, #tpu.memory_space<vmem>>, vector<1x1x128xf32>
    %336 = vector.shape_cast %335 : vector<1x1x128xf32> to vector<1x128xf32>
    %337 = vector.broadcast %336 : vector<1x128xf32> to vector<6x128xf32>
    %338 = arith.addf %334, %337 : vector<6x128xf32>
    %339 = arith.mulf %338, %338 : vector<6x128xf32>
    %340 = arith.mulf %338, %339 : vector<6x128xf32>
    %cst_148 = arith.constant 4.471500e-02 : f32
    %341 = vector.broadcast %cst_148 : f32 to vector<6x128xf32>
    %342 = arith.mulf %341, %340 : vector<6x128xf32>
    %343 = arith.addf %338, %342 : vector<6x128xf32>
    %cst_149 = arith.constant 0.797884583 : f32
    %344 = vector.broadcast %cst_149 : f32 to vector<6x128xf32>
    %345 = arith.mulf %344, %343 : vector<6x128xf32>
    %346 = math.tanh %345 : vector<6x128xf32>
    %cst_150 = arith.constant 1.000000e+00 : f32
    %347 = vector.broadcast %cst_150 : f32 to vector<6x128xf32>
    %348 = arith.addf %347, %346 : vector<6x128xf32>
    %cst_151 = arith.constant 5.000000e-01 : f32
    %349 = vector.broadcast %cst_151 : f32 to vector<6x128xf32>
    %350 = arith.mulf %349, %348 : vector<6x128xf32>
    %351 = arith.mulf %338, %350 : vector<6x128xf32>
    %c1_152 = arith.constant 1 : index
    %c0_153 = arith.constant 0 : index
    %c0_154 = arith.constant 0 : index
    %352 = vector.load %arg14[%c1_152, %c0_153, %c0_154] : memref<2x128x32xf32, #tpu.memory_space<vmem>>, vector<1x128x32xf32>
    %353 = vector.shape_cast %352 : vector<1x128x32xf32> to vector<128x32xf32>
    %cst_155 = arith.constant dense<0.000000e+00> : vector<6x32xf32>
    %354 = tpu.matmul %351, %353, %cst_155 {dimension_numbers = #tpu.dot_dimension_numbers<[1], [0], [0], [1], [0, 0, 1, 1], [], []>} : vector<6x128xf32>, vector<128x32xf32>, vector<6x32xf32> -> vector<6x32xf32>
    %c1_156 = arith.constant 1 : index
    %c0_157 = arith.constant 0 : index
    %c0_158 = arith.constant 0 : index
    %355 = vector.load %arg15[%c1_156, %c0_157, %c0_158] : memref<2x1x32xf32, #tpu.memory_space<vmem>>, vector<1x1x32xf32>
    %356 = vector.shape_cast %355 : vector<1x1x32xf32> to vector<1x32xf32>
    %357 = vector.broadcast %356 : vector<1x32xf32> to vector<6x32xf32>
    %358 = arith.addf %354, %357 : vector<6x32xf32>
    %359 = arith.addf %305, %358 : vector<6x32xf32>
    %c0_159 = arith.constant 0 : index
    %c0_160 = arith.constant 0 : index
    %360 = vector.load %arg16[%c0_159, %c0_160] : memref<1x32xf32, #tpu.memory_space<vmem>>, vector<1x32xf32>
    %c0_161 = arith.constant 0 : index
    %c0_162 = arith.constant 0 : index
    %361 = vector.load %arg17[%c0_161, %c0_162] : memref<1x32xf32, #tpu.memory_space<vmem>>, vector<1x32xf32>
    %cst_163 = arith.constant dense<0.000000e+00> : vector<6xf32>
    %362 = vector.multi_reduction <add>, %359, %cst_163 [1] : vector<6x32xf32> to vector<6xf32>
    %363 = vector.shape_cast %362 : vector<6xf32> to vector<6x1xf32>
    %cst_164 = arith.constant 3.200000e+01 : f32
    %364 = vector.broadcast %cst_164 : f32 to vector<6x1xf32>
    %365 = arith.divf %363, %364 : vector<6x1xf32>
    %366 = vector.broadcast %365 : vector<6x1xf32> to vector<6x32xf32>
    %367 = arith.subf %359, %366 : vector<6x32xf32>
    %368 = arith.mulf %367, %367 : vector<6x32xf32>
    %cst_165 = arith.constant dense<0.000000e+00> : vector<6xf32>
    %369 = vector.multi_reduction <add>, %368, %cst_165 [1] : vector<6x32xf32> to vector<6xf32>
    %370 = vector.shape_cast %369 : vector<6xf32> to vector<6x1xf32>
    %cst_166 = arith.constant 3.200000e+01 : f32
    %371 = vector.broadcast %cst_166 : f32 to vector<6x1xf32>
    %372 = arith.divf %370, %371 : vector<6x1xf32>
    %373 = vector.broadcast %365 : vector<6x1xf32> to vector<6x32xf32>
    %374 = arith.subf %359, %373 : vector<6x32xf32>
    %cst_167 = arith.constant 9.99999997E-7 : f32
    %375 = vector.broadcast %cst_167 : f32 to vector<6x1xf32>
    %376 = arith.addf %372, %375 : vector<6x1xf32>
    %377 = math.rsqrt %376 : vector<6x1xf32>
    %378 = vector.broadcast %377 : vector<6x1xf32> to vector<6x32xf32>
    %379 = arith.mulf %374, %378 : vector<6x32xf32>
    %380 = vector.broadcast %360 : vector<1x32xf32> to vector<6x32xf32>
    %381 = arith.mulf %379, %380 : vector<6x32xf32>
    %382 = vector.broadcast %361 : vector<1x32xf32> to vector<6x32xf32>
    %383 = arith.addf %381, %382 : vector<6x32xf32>
    %384 = vector.extract_strided_slice %383 {offsets = [0, 0], sizes = [1, 32], strides = [1, 1]} : vector<6x32xf32> to vector<1x32xf32>
    %385 = vector.extract_strided_slice %383 {offsets = [1, 0], sizes = [1, 32], strides = [1, 1]} : vector<6x32xf32> to vector<1x32xf32>
    %386 = arith.addf %384, %385 : vector<1x32xf32>
    %cst_168 = arith.constant 5.000000e-01 : f32
    %387 = vector.broadcast %cst_168 : f32 to vector<1x32xf32>
    %388 = arith.mulf %386, %387 : vector<1x32xf32>
    %c0_169 = arith.constant 0 : index
    %c0_170 = arith.constant 0 : index
    %389 = vector.load %arg18[%c0_169, %c0_170] : memref<1x32xf32, #tpu.memory_space<vmem>>, vector<1x32xf32>
    %c0_171 = arith.constant 0 : index
    %c0_172 = arith.constant 0 : index
    %390 = vector.load %arg19[%c0_171, %c0_172] : memref<1x32xf32, #tpu.memory_space<vmem>>, vector<1x32xf32>
    %cst_173 = arith.constant dense<0.000000e+00> : vector<1xf32>
    %391 = vector.multi_reduction <add>, %388, %cst_173 [1] : vector<1x32xf32> to vector<1xf32>
    %392 = vector.shape_cast %391 : vector<1xf32> to vector<1x1xf32>
    %cst_174 = arith.constant 3.200000e+01 : f32
    %393 = vector.broadcast %cst_174 : f32 to vector<1x1xf32>
    %394 = arith.divf %392, %393 : vector<1x1xf32>
    %395 = vector.broadcast %394 : vector<1x1xf32> to vector<1x32xf32>
    %396 = arith.subf %388, %395 : vector<1x32xf32>
    %397 = arith.mulf %396, %396 : vector<1x32xf32>
    %cst_175 = arith.constant dense<0.000000e+00> : vector<1xf32>
    %398 = vector.multi_reduction <add>, %397, %cst_175 [1] : vector<1x32xf32> to vector<1xf32>
    %399 = vector.shape_cast %398 : vector<1xf32> to vector<1x1xf32>
    %cst_176 = arith.constant 3.200000e+01 : f32
    %400 = vector.broadcast %cst_176 : f32 to vector<1x1xf32>
    %401 = arith.divf %399, %400 : vector<1x1xf32>
    %402 = vector.broadcast %394 : vector<1x1xf32> to vector<1x32xf32>
    %403 = arith.subf %388, %402 : vector<1x32xf32>
    %cst_177 = arith.constant 9.99999997E-7 : f32
    %404 = vector.broadcast %cst_177 : f32 to vector<1x1xf32>
    %405 = arith.addf %401, %404 : vector<1x1xf32>
    %406 = math.rsqrt %405 : vector<1x1xf32>
    %407 = vector.broadcast %406 : vector<1x1xf32> to vector<1x32xf32>
    %408 = arith.mulf %403, %407 : vector<1x32xf32>
    %409 = arith.mulf %408, %389 : vector<1x32xf32>
    %410 = arith.addf %409, %390 : vector<1x32xf32>
    %c0_178 = arith.constant 0 : index
    %c0_179 = arith.constant 0 : index
    %411 = vector.load %arg20[%c0_178, %c0_179] : memref<32x10xf32, #tpu.memory_space<vmem>>, vector<32x10xf32>
    %cst_180 = arith.constant dense<0.000000e+00> : vector<1x10xf32>
    %412 = tpu.matmul %410, %411, %cst_180 {dimension_numbers = #tpu.dot_dimension_numbers<[1], [0], [0], [1], [0, 0, 1, 1], [], []>} : vector<1x32xf32>, vector<32x10xf32>, vector<1x10xf32> -> vector<1x10xf32>
    %c0_181 = arith.constant 0 : index
    %c0_182 = arith.constant 0 : index
    %413 = vector.load %arg21[%c0_181, %c0_182] : memref<1x10xf32, #tpu.memory_space<vmem>>, vector<1x10xf32>
    %414 = arith.addf %412, %413 : vector<1x10xf32>
    %c0_183 = arith.constant 0 : index
    %c0_184 = arith.constant 0 : index
    %c0_185 = arith.constant 0 : index
    %415 = vector.load %arg22[%c0_183, %c0_184, %c0_185] : memref<1x1x10xf32, #tpu.memory_space<vmem>>, vector<1x1x10xf32>
    %416 = vector.shape_cast %415 : vector<1x1x10xf32> to vector<1x10xf32>
    %417 = vector.shape_cast %414 : vector<1x10xf32> to vector<1x1x10xf32>
    tpu.vector_store %arg22[%c0_183, %c0_184, %c0_185], %417 {strides = array<i32>} : memref<1x1x10xf32, #tpu.memory_space<vmem>>, vector<1x1x10xf32>,
    return
  }
  func.func @transform_0(%arg0: i32) -> (i32, i32, i32) {
    %c0_i32 = arith.constant 0 : i32
    %c0_i32_0 = arith.constant 0 : i32
    %c0_i32_1 = arith.constant 0 : i32
    return %arg0, %c0_i32, %c0_i32_0 : i32, i32, i32
  }
  func.func @transform_1(%arg0: i32) -> (i32, i32) {
    %c0_i32 = arith.constant 0 : i32
    %c0_i32_0 = arith.constant 0 : i32
    %c0_i32_1 = arith.constant 0 : i32
    return %c0_i32, %c0_i32_0 : i32, i32
  }
  func.func @transform_2(%arg0: i32) -> (i32, i32) {
    %c0_i32 = arith.constant 0 : i32
    %c0_i32_0 = arith.constant 0 : i32
    %c0_i32_1 = arith.constant 0 : i32
    return %c0_i32, %c0_i32_0 : i32, i32
  }
  func.func @transform_3(%arg0: i32) -> (i32, i32, i32) {
    %c0_i32 = arith.constant 0 : i32
    %c0_i32_0 = arith.constant 0 : i32
    %c0_i32_1 = arith.constant 0 : i32
    %c0_i32_2 = arith.constant 0 : i32
    return %c0_i32, %c0_i32_0, %c0_i32_1 : i32, i32, i32
  }
  func.func @transform_4(%arg0: i32) -> (i32, i32, i32) {
    %c0_i32 = arith.constant 0 : i32
    %c0_i32_0 = arith.constant 0 : i32
    %c0_i32_1 = arith.constant 0 : i32
    %c0_i32_2 = arith.constant 0 : i32
    return %c0_i32, %c0_i32_0, %c0_i32_1 : i32, i32, i32
  }
  func.func @transform_5(%arg0: i32) -> (i32, i32, i32) {
    %c0_i32 = arith.constant 0 : i32
    %c0_i32_0 = arith.constant 0 : i32
    %c0_i32_1 = arith.constant 0 : i32
    %c0_i32_2 = arith.constant 0 : i32
    return %c0_i32, %c0_i32_0, %c0_i32_1 : i32, i32, i32
  }
  func.func @transform_6(%arg0: i32) -> (i32, i32, i32) {
    %c0_i32 = arith.constant 0 : i32
    %c0_i32_0 = arith.constant 0 : i32
    %c0_i32_1 = arith.constant 0 : i32
    %c0_i32_2 = arith.constant 0 : i32
    return %c0_i32, %c0_i32_0, %c0_i32_1 : i32, i32, i32
  }
  func.func @transform_7(%arg0: i32) -> (i32, i32, i32) {
    %c0_i32 = arith.constant 0 : i32
    %c0_i32_0 = arith.constant 0 : i32
    %c0_i32_1 = arith.constant 0 : i32
    %c0_i32_2 = arith.constant 0 : i32
    return %c0_i32, %c0_i32_0, %c0_i32_1 : i32, i32, i32
  }
  func.func @transform_8(%arg0: i32) -> (i32, i32, i32) {
    %c0_i32 = arith.constant 0 : i32
    %c0_i32_0 = arith.constant 0 : i32
    %c0_i32_1 = arith.constant 0 : i32
    %c0_i32_2 = arith.constant 0 : i32
    return %c0_i32, %c0_i32_0, %c0_i32_1 : i32, i32, i32
  }
  func.func @transform_9(%arg0: i32) -> (i32, i32, i32) {
    %c0_i32 = arith.constant 0 : i32
    %c0_i32_0 = arith.constant 0 : i32
    %c0_i32_1 = arith.constant 0 : i32
    %c0_i32_2 = arith.constant 0 : i32
    return %c0_i32, %c0_i32_0, %c0_i32_1 : i32, i32, i32
  }
  func.func @transform_10(%arg0: i32) -> (i32, i32, i32) {
    %c0_i32 = arith.constant 0 : i32
    %c0_i32_0 = arith.constant 0 : i32
    %c0_i32_1 = arith.constant 0 : i32
    %c0_i32_2 = arith.constant 0 : i32
    return %c0_i32, %c0_i32_0, %c0_i32_1 : i32, i32, i32
  }
  func.func @transform_11(%arg0: i32) -> (i32, i32, i32) {
    %c0_i32 = arith.constant 0 : i32
    %c0_i32_0 = arith.constant 0 : i32
    %c0_i32_1 = arith.constant 0 : i32
    %c0_i32_2 = arith.constant 0 : i32
    return %c0_i32, %c0_i32_0, %c0_i32_1 : i32, i32, i32
  }
  func.func @transform_12(%arg0: i32) -> (i32, i32, i32) {
    %c0_i32 = arith.constant 0 : i32
    %c0_i32_0 = arith.constant 0 : i32
    %c0_i32_1 = arith.constant 0 : i32
    %c0_i32_2 = arith.constant 0 : i32
    return %c0_i32, %c0_i32_0, %c0_i32_1 : i32, i32, i32
  }
  func.func @transform_13(%arg0: i32) -> (i32, i32, i32) {
    %c0_i32 = arith.constant 0 : i32
    %c0_i32_0 = arith.constant 0 : i32
    %c0_i32_1 = arith.constant 0 : i32
    %c0_i32_2 = arith.constant 0 : i32
    return %c0_i32, %c0_i32_0, %c0_i32_1 : i32, i32, i32
  }
  func.func @transform_14(%arg0: i32) -> (i32, i32, i32) {
    %c0_i32 = arith.constant 0 : i32
    %c0_i32_0 = arith.constant 0 : i32
    %c0_i32_1 = arith.constant 0 : i32
    %c0_i32_2 = arith.constant 0 : i32
    return %c0_i32, %c0_i32_0, %c0_i32_1 : i32, i32, i32
  }
  func.func @transform_15(%arg0: i32) -> (i32, i32) {
    %c0_i32 = arith.constant 0 : i32
    %c0_i32_0 = arith.constant 0 : i32
    %c0_i32_1 = arith.constant 0 : i32
    return %c0_i32, %c0_i32_0 : i32, i32
  }
  func.func @transform_16(%arg0: i32) -> (i32, i32) {
    %c0_i32 = arith.constant 0 : i32
    %c0_i32_0 = arith.constant 0 : i32
    %c0_i32_1 = arith.constant 0 : i32
    return %c0_i32, %c0_i32_0 : i32, i32
  }
  func.func @transform_17(%arg0: i32) -> (i32, i32) {
    %c0_i32 = arith.constant 0 : i32
    %c0_i32_0 = arith.constant 0 : i32
    %c0_i32_1 = arith.constant 0 : i32
    return %c0_i32, %c0_i32_0 : i32, i32
  }
  func.func @transform_18(%arg0: i32) -> (i32, i32) {
    %c0_i32 = arith.constant 0 : i32
    %c0_i32_0 = arith.constant 0 : i32
    %c0_i32_1 = arith.constant 0 : i32
    return %c0_i32, %c0_i32_0 : i32, i32
  }
  func.func @transform_19(%arg0: i32) -> (i32, i32) {
    %c0_i32 = arith.constant 0 : i32
    %c0_i32_0 = arith.constant 0 : i32
    %c0_i32_1 = arith.constant 0 : i32
    return %c0_i32, %c0_i32_0 : i32, i32
  }
  func.func @transform_20(%arg0: i32) -> (i32, i32) {
    %c0_i32 = arith.constant 0 : i32
    %c0_i32_0 = arith.constant 0 : i32
    %c0_i32_1 = arith.constant 0 : i32
    return %c0_i32, %c0_i32_0 : i32, i32
  }
  func.func @transform_21(%arg0: i32) -> (i32, i32, i32) {
    %c0_i32 = arith.constant 0 : i32
    %c0_i32_0 = arith.constant 0 : i32
    %c0_i32_1 = arith.constant 0 : i32
    return %arg0, %c0_i32, %c0_i32_0 : i32, i32, i32
  }
}

</mosaic_0001>

<llo_original>
// kernel: demucast_forward.1
$region0: #{demucast_forward.1}
  #allocation0 [shape = 'u32[]', space=smem, size = 0x4, offset = 0x4, fixed_abs, tag = 'smem constant byte address 0x4 - core index']
  #allocation1 [shape = 'u32[72,128]{1,0:T(1,128)}', space=vmem, size = 0x9000, scoped, tag = 'internal scratch']
  %s0 = inlined_call_operand.vmem [shape: f32[2,6,64], index: 0, kind: input, shape index: {}]
  %s1 = inlined_call_operand.vmem [shape: f32[6,32], index: 1, kind: input, shape index: {}]
  %s2 = inlined_call_operand.vmem [shape: f32[64,32], index: 2, kind: input, shape index: {}]
  %s3 = inlined_call_operand.vmem [shape: f32[2,1,32], index: 3, kind: input, shape index: {}]
  %s4 = inlined_call_operand.vmem [shape: f32[2,1,32], index: 4, kind: input, shape index: {}]
  %s5 = inlined_call_operand.vmem [shape: f32[2,32,96], index: 5, kind: input, shape index: {}]
  %s6 = inlined_call_operand.vmem [shape: f32[2,1,96], index: 6, kind: input, shape index: {}]
  %s7 = inlined_call_operand.vmem [shape: f32[2,32,32], index: 7, kind: input, shape index: {}]
  %s8 = inlined_call_operand.vmem [shape: f32[2,1,32], index: 8, kind: input, shape index: {}]
  %s9 = inlined_call_operand.vmem [shape: f32[2,1,32], index: 9, kind: input, shape index: {}]
  %s10 = inlined_call_operand.vmem [shape: f32[2,1,32], index: 10, kind: input, shape index: {}]
  %s11 = inlined_call_operand.vmem [shape: f32[2,32,128], index: 11, kind: input, shape index: {}]
  %s12 = inlined_call_operand.vmem [shape: f32[2,1,128], index: 12, kind: input, shape index: {}]
  %s13 = inlined_call_operand.vmem [shape: f32[2,128,32], index: 13, kind: input, shape index: {}]
  %s14 = inlined_call_operand.vmem [shape: f32[2,1,32], index: 14, kind: input, shape index: {}]
  %s15 = inlined_call_operand.vmem [shape: f32[1,32], index: 15, kind: input, shape index: {}]
  %s16 = inlined_call_operand.vmem [shape: f32[1,32], index: 16, kind: input, shape index: {}]
  %s17 = inlined_call_operand.vmem [shape: f32[1,32], index: 17, kind: input, shape index: {}]
  %s18 = inlined_call_operand.vmem [shape: f32[1,32], index: 18, kind: input, shape index: {}]
  %s19 = inlined_call_operand.vmem [shape: f32[32,10], index: 19, kind: input, shape index: {}]
  %s20 = inlined_call_operand.vmem [shape: f32[1,10], index: 20, kind: input, shape index: {}]
  %s21 = inlined_call_operand.hbm [shape: f32[2,1,10], index: 21, kind: output, shape index: {}]
  %s22 = sld [smem:[#allocation0]]
  $region117: #{demucast_forward.1} parent=0
    _
  %s24 = ssub.s32 1, %s22
  %s25 = scalar_select 0, %s24, %s22
  $region1: #{demucast_forward.1} parent=0
    #allocation2 [shape = 'u8[1024]{0}', space=vmem, size = 0x400, scoped, tag = 'output window, operand 0']
    #allocation3 [shape = 's32[2]{0}', space=sflag, size = 0x8, scoped, tag = 'scoped memory for demucast_forward.1']
    %26 = vsyncpa [#allocation3], 0
    %s27 = scalar_lea.sflag [#allocation3], 1
    %28 = vsyncpa %s27, 0
    loop: start=0, step=1, limit=4
    $region2: #{demucast_forward.1} parent=1 // loop_pre_header
      _
    $region3: #{demucast_forward.1} parent=1 // loop_header
      %s30 = sphi 0, %s34
      %p31 = scmp.ge.s32.totalorder %s30, 4
      %s40 = sphi 0, %s42
      %s43 = sphi 0, %s40
      %s44 = sphi 0, %s43
      %s60 = sphi 0, %s44
      %s64 = sphi 0, %s64
      %s66 = sphi 0, %s64
      %s67 = sphi 0, %s66
      %s81 = sphi 0, %s67
      %s85 = sphi 0, %s85
      %s87 = sphi 0, %s85
      %s88 = sphi 0, %s87
      %s102 = sphi 0, %s88
      %s106 = sphi 0, %s106
      %s108 = sphi 0, %s106
      %s109 = sphi 0, %s108
      %s123 = sphi 0, %s109
      %s127 = sphi 0, %s127
      %s129 = sphi 0, %s127
      %s130 = sphi 0, %s129
      %s144 = sphi 0, %s130
      %s148 = sphi 0, %s148
      %s150 = sphi 0, %s148
      %s151 = sphi 0, %s150
      %s165 = sphi 0, %s151
      %s169 = sphi 0, %s169
      %s171 = sphi 0, %s169
      %s172 = sphi 0, %s171
      %s186 = sphi 0, %s172
      %s190 = sphi 0, %s190
      %s192 = sphi 0, %s190
      %s193 = sphi 0, %s192
      %s207 = sphi 0, %s193
      %s211 = sphi 0, %s211
      %s213 = sphi 0, %s211
      %s214 = sphi 0, %s213
      %s228 = sphi 0, %s214
      %s232 = sphi 0, %s232
      %s234 = sphi 0, %s232
      %s235 = sphi 0, %s234
      %s249 = sphi 0, %s235
      %s253 = sphi 0, %s253
      %s255 = sphi 0, %s253
      %s256 = sphi 0, %s255
      %s270 = sphi 0, %s256
      %s274 = sphi 0, %s274
      %s276 = sphi 0, %s274
      %s277 = sphi 0, %s276
      %s291 = sphi 0, %s277
      %s295 = sphi 0, %s295
      %s297 = sphi 0, %s295
      %s298 = sphi 0, %s297
      %s312 = sphi 0, %s298
      %s316 = sphi 0, %s316
      %s318 = sphi 0, %s316
      %s319 = sphi 0, %s318
      %s333 = sphi 0, %s319
      %s337 = sphi 0, %s337
      %s339 = sphi 0, %s337
      %s340 = sphi 0, %s339
      %s354 = sphi 0, %s340
      %s358 = sphi 0, %s358
      %s360 = sphi 0, %s358
      %s361 = sphi 0, %s360
      %s375 = sphi 0, %s361
      %s379 = sphi 0, %s379
      %s381 = sphi 0, %s379
      %s382 = sphi 0, %s381
      %s396 = sphi 0, %s382
      %s400 = sphi 0, %s400
      %s402 = sphi 0, %s400
      %s403 = sphi 0, %s402
      %s417 = sphi 0, %s403
      %s421 = sphi 0, %s421
      %s423 = sphi 0, %s421
      %s424 = sphi 0, %s423
      %s438 = sphi 0, %s424
      %s442 = sphi 0, %s442
      %s444 = sphi 0, %s442
      %s445 = sphi 0, %s444
      %s459 = sphi 0, %s445
      %s463 = sphi 0, %s463
      %s465 = sphi 0, %s463
      %s466 = sphi 0, %s465
      %s480 = sphi 0, %s466
      %s486 = sphi 0, %s488
      %s489 = sphi 0, %s486
      %s490 = sphi 0, %s489
      %s506 = sphi 0, %s490
    $region4: #{demucast_forward.1} parent=1 // loop_header_branch
      %33 = sbr.rel (%p31) target = $region8
    $region5: #{demucast_forward.1} parent=1 // loop_body
      %s35 = ssub.s32 %s30, 1
      %s36 = ssub.s32 %s30, 2
      %s37 = sadd.s32 %s30, 1
      %s38 = ssub.s32 %s30, %s37
      %p39 = scmp.eq.s32.totalorder %s38, 0
      %s41 = sadd.s32 %s40, 1
      %s42 = scalar_select %p39, %s40, %s41
      %p45 = pneg %p39
      %p46 = scmp.eq.s32.totalorder %s30, 1
      %p47 = por %p45, %p46
      %p48 = scmp.ne.s32.totalorder %s40, %s43
      %p49 = scmp.eq.s32.totalorder %s30, 0
      %p50 = por %p48, %p49
      %p51 = scmp.ne.s32.totalorder %s40, %s43
      %p52 = scmp.eq.s32.totalorder %s35, 1
      %p53 = por %p51, %p52
      %p54 = scmp.ne.s32.totalorder %s43, %s44
      %p55 = scmp.eq.s32.totalorder %s35, 0
      %p56 = por %p54, %p55
      %p57 = scmp.ne.s32.totalorder %s43, %s44
      %p58 = scmp.eq.s32.totalorder %s36, 1
      %p59 = por %p57, %p58
      %p61 = scmp.ne.s32.totalorder %s44, %s60
      %p62 = scmp.eq.s32.totalorder %s36, 0
      %p63 = por %p61, %p62
      %s65 = sadd.s32 %s64, 1
      %p68 = scmp.eq.s32.totalorder %s30, 1
      %p69 = scmp.ne.s32.totalorder %s64, %s66
      %p70 = scmp.eq.s32.totalorder %s30, 0
      %p71 = por %p69, %p70
      %p72 = scmp.ne.s32.totalorder %s64, %s66
      %p73 = scmp.eq.s32.totalorder %s35, 1
      %p74 = por %p72, %p73
      %p75 = scmp.ne.s32.totalorder %s66, %s67
      %p76 = scmp.eq.s32.totalorder %s35, 0
      %p77 = por %p75, %p76
      %p78 = scmp.ne.s32.totalorder %s66, %s67
      %p79 = scmp.eq.s32.totalorder %s36, 1
      %p80 = por %p78, %p79
      %p82 = scmp.ne.s32.totalorder %s67, %s81
      %p83 = scmp.eq.s32.totalorder %s36, 0
      %p84 = por %p82, %p83
      %s86 = sadd.s32 %s85, 1
      %p89 = scmp.eq.s32.totalorder %s30, 1
      %p90 = scmp.ne.s32.totalorder %s85, %s87
      %p91 = scmp.eq.s32.totalorder %s30, 0
      %p92 = por %p90, %p91
      %p93 = scmp.ne.s32.totalorder %s85, %s87
      %p94 = scmp.eq.s32.totalorder %s35, 1
      %p95 = por %p93, %p94
      %p96 = scmp.ne.s32.totalorder %s87, %s88
      %p97 = scmp.eq.s32.totalorder %s35, 0
      %p98 = por %p96, %p97
      %p99 = scmp.ne.s32.totalorder %s87, %s88
      %p100 = scmp.eq.s32.totalorder %s36, 1
      %p101 = por %p99, %p100
      %p103 = scmp.ne.s32.totalorder %s88, %s102
      %p104 = scmp.eq.s32.totalorder %s36, 0
      %p105 = por %p103, %p104
      %s107 = sadd.s32 %s106, 1
      %p110 = scmp.eq.s32.totalorder %s30, 1
      %p111 = scmp.ne.s32.totalorder %s106, %s108
      %p112 = scmp.eq.s32.totalorder %s30, 0
      %p113 = por %p111, %p112
      %p114 = scmp.ne.s32.totalorder %s106, %s108
      %p115 = scmp.eq.s32.totalorder %s35, 1
      %p116 = por %p114, %p115
      %p117 = scmp.ne.s32.totalorder %s108, %s109
      %p118 = scmp.eq.s32.totalorder %s35, 0
      %p119 = por %p117, %p118
      %p120 = scmp.ne.s32.totalorder %s108, %s109
      %p121 = scmp.eq.s32.totalorder %s36, 1
      %p122 = por %p120, %p121
      %p124 = scmp.ne.s32.totalorder %s109, %s123
      %p125 = scmp.eq.s32.totalorder %s36, 0
      %p126 = por %p124, %p125
      %s128 = sadd.s32 %s127, 1
      %p131 = scmp.eq.s32.totalorder %s30, 1
      %p132 = scmp.ne.s32.totalorder %s127, %s129
      %p133 = scmp.eq.s32.totalorder %s30, 0
      %p134 = por %p132, %p133
      %p135 = scmp.ne.s32.totalorder %s127, %s129
      %p136 = scmp.eq.s32.totalorder %s35, 1
      %p137 = por %p135, %p136
      %p138 = scmp.ne.s32.totalorder %s129, %s130
      %p139 = scmp.eq.s32.totalorder %s35, 0
      %p140 = por %p138, %p139
      %p141 = scmp.ne.s32.totalorder %s129, %s130
      %p142 = scmp.eq.s32.totalorder %s36, 1
      %p143 = por %p141, %p142
      %p145 = scmp.ne.s32.totalorder %s130, %s144
      %p146 = scmp.eq.s32.totalorder %s36, 0
      %p147 = por %p145, %p146
      %s149 = sadd.s32 %s148, 1
      %p152 = scmp.eq.s32.totalorder %s30, 1
      %p153 = scmp.ne.s32.totalorder %s148, %s150
      %p154 = scmp.eq.s32.totalorder %s30, 0
      %p155 = por %p153, %p154
      %p156 = scmp.ne.s32.totalorder %s148, %s150
      %p157 = scmp.eq.s32.totalorder %s35, 1
      %p158 = por %p156, %p157
      %p159 = scmp.ne.s32.totalorder %s150, %s151
      %p160 = scmp.eq.s32.totalorder %s35, 0
      %p161 = por %p159, %p160
      %p162 = scmp.ne.s32.totalorder %s150, %s151
      %p163 = scmp.eq.s32.totalorder %s36, 1
      %p164 = por %p162, %p163
      %p166 = scmp.ne.s32.totalorder %s151, %s165
      %p167 = scmp.eq.s32.totalorder %s36, 0
      %p168 = por %p166, %p167
      %s170 = sadd.s32 %s169, 1
      %p173 = scmp.eq.s32.totalorder %s30, 1
      %p174 = scmp.ne.s32.totalorder %s169, %s171
      %p175 = scmp.eq.s32.totalorder %s30, 0
      %p176 = por %p174, %p175
      %p177 = scmp.ne.s32.totalorder %s169, %s171
      %p178 = scmp.eq.s32.totalorder %s35, 1
      %p179 = por %p177, %p178
      %p180 = scmp.ne.s32.totalorder %s171, %s172
      %p181 = scmp.eq.s32.totalorder %s35, 0
      %p182 = por %p180, %p181
      %p183 = scmp.ne.s32.totalorder %s171, %s172
      %p184 = scmp.eq.s32.totalorder %s36, 1
      %p185 = por %p183, %p184
      %p187 = scmp.ne.s32.totalorder %s172, %s186
      %p188 = scmp.eq.s32.totalorder %s36, 0
      %p189 = por %p187, %p188
      %s191 = sadd.s32 %s190, 1
      %p194 = scmp.eq.s32.totalorder %s30, 1
      %p195 = scmp.ne.s32.totalorder %s190, %s192
      %p196 = scmp.eq.s32.totalorder %s30, 0
      %p197 = por %p195, %p196
      %p198 = scmp.ne.s32.totalorder %s190, %s192
      %p199 = scmp.eq.s32.totalorder %s35, 1
      %p200 = por %p198, %p199
      %p201 = scmp.ne.s32.totalorder %s192, %s193
      %p202 = scmp.eq.s32.totalorder %s35, 0
      %p203 = por %p201, %p202
      %p204 = scmp.ne.s32.totalorder %s192, %s193
      %p205 = scmp.eq.s32.totalorder %s36, 1
      %p206 = por %p204, %p205
      %p208 = scmp.ne.s32.totalorder %s193, %s207
      %p209 = scmp.eq.s32.totalorder %s36, 0
      %p210 = por %p208, %p209
      %s212 = sadd.s32 %s211, 1
      %p215 = scmp.eq.s32.totalorder %s30, 1
      %p216 = scmp.ne.s32.totalorder %s211, %s213
      %p217 = scmp.eq.s32.totalorder %s30, 0
      %p218 = por %p216, %p217
      %p219 = scmp.ne.s32.totalorder %s211, %s213
      %p220 = scmp.eq.s32.totalorder %s35, 1
      %p221 = por %p219, %p220
      %p222 = scmp.ne.s32.totalorder %s213, %s214
      %p223 = scmp.eq.s32.totalorder %s35, 0
      %p224 = por %p222, %p223
      %p225 = scmp.ne.s32.totalorder %s213, %s214
      %p226 = scmp.eq.s32.totalorder %s36, 1
      %p227 = por %p225, %p226
      %p229 = scmp.ne.s32.totalorder %s214, %s228
      %p230 = scmp.eq.s32.totalorder %s36, 0
      %p231 = por %p229, %p230
      %s233 = sadd.s32 %s232, 1
      %p236 = scmp.eq.s32.totalorder %s30, 1
      %p237 = scmp.ne.s32.totalorder %s232, %s234
      %p238 = scmp.eq.s32.totalorder %s30, 0
      %p239 = por %p237, %p238
      %p240 = scmp.ne.s32.totalorder %s232, %s234
      %p241 = scmp.eq.s32.totalorder %s35, 1
      %p242 = por %p240, %p241
      %p243 = scmp.ne.s32.totalorder %s234, %s235
      %p244 = scmp.eq.s32.totalorder %s35, 0
      %p245 = por %p243, %p244
      %p246 = scmp.ne.s32.totalorder %s234, %s235
      %p247 = scmp.eq.s32.totalorder %s36, 1
      %p248 = por %p246, %p247
      %p250 = scmp.ne.s32.totalorder %s235, %s249
      %p251 = scmp.eq.s32.totalorder %s36, 0
      %p252 = por %p250, %p251
      %s254 = sadd.s32 %s253, 1
      %p257 = scmp.eq.s32.totalorder %s30, 1
      %p258 = scmp.ne.s32.totalorder %s253, %s255
      %p259 = scmp.eq.s32.totalorder %s30, 0
      %p260 = por %p258, %p259
      %p261 = scmp.ne.s32.totalorder %s253, %s255
      %p262 = scmp.eq.s32.totalorder %s35, 1
      %p263 = por %p261, %p262
      %p264 = scmp.ne.s32.totalorder %s255, %s256
      %p265 = scmp.eq.s32.totalorder %s35, 0
      %p266 = por %p264, %p265
      %p267 = scmp.ne.s32.totalorder %s255, %s256
      %p268 = scmp.eq.s32.totalorder %s36, 1
      %p269 = por %p267, %p268
      %p271 = scmp.ne.s32.totalorder %s256, %s270
      %p272 = scmp.eq.s32.totalorder %s36, 0
      %p273 = por %p271, %p272
      %s275 = sadd.s32 %s274, 1
      %p278 = scmp.eq.s32.totalorder %s30, 1
      %p279 = scmp.ne.s32.totalorder %s274, %s276
      %p280 = scmp.eq.s32.totalorder %s30, 0
      %p281 = por %p279, %p280
      %p282 = scmp.ne.s32.totalorder %s274, %s276
      %p283 = scmp.eq.s32.totalorder %s35, 1
      %p284 = por %p282, %p283
      %p285 = scmp.ne.s32.totalorder %s276, %s277
      %p286 = scmp.eq.s32.totalorder %s35, 0
      %p287 = por %p285, %p286
      %p288 = scmp.ne.s32.totalorder %s276, %s277
      %p289 = scmp.eq.s32.totalorder %s36, 1
      %p290 = por %p288, %p289
      %p292 = scmp.ne.s32.totalorder %s277, %s291
      %p293 = scmp.eq.s32.totalorder %s36, 0
      %p294 = por %p292, %p293
      %s296 = sadd.s32 %s295, 1
      %p299 = scmp.eq.s32.totalorder %s30, 1
      %p300 = scmp.ne.s32.totalorder %s295, %s297
      %p301 = scmp.eq.s32.totalorder %s30, 0
      %p302 = por %p300, %p301
      %p303 = scmp.ne.s32.totalorder %s295, %s297
      %p304 = scmp.eq.s32.totalorder %s35, 1
      %p305 = por %p303, %p304
      %p306 = scmp.ne.s32.totalorder %s297, %s298
      %p307 = scmp.eq.s32.totalorder %s35, 0
      %p308 = por %p306, %p307
      %p309 = scmp.ne.s32.totalorder %s297, %s298
      %p310 = scmp.eq.s32.totalorder %s36, 1
      %p311 = por %p309, %p310
      %p313 = scmp.ne.s32.totalorder %s298, %s312
      %p314 = scmp.eq.s32.totalorder %s36, 0
      %p315 = por %p313, %p314
      %s317 = sadd.s32 %s316, 1
      %p320 = scmp.eq.s32.totalorder %s30, 1
      %p321 = scmp.ne.s32.totalorder %s316, %s318
      %p322 = scmp.eq.s32.totalorder %s30, 0
      %p323 = por %p321, %p322
      %p324 = scmp.ne.s32.totalorder %s316, %s318
      %p325 = scmp.eq.s32.totalorder %s35, 1
      %p326 = por %p324, %p325
      %p327 = scmp.ne.s32.totalorder %s318, %s319
      %p328 = scmp.eq.s32.totalorder %s35, 0
      %p329 = por %p327, %p328
      %p330 = scmp.ne.s32.totalorder %s318, %s319
      %p331 = scmp.eq.s32.totalorder %s36, 1
      %p332 = por %p330, %p331
      %p334 = scmp.ne.s32.totalorder %s319, %s333
      %p335 = scmp.eq.s32.totalorder %s36, 0
      %p336 = por %p334, %p335
      %s338 = sadd.s32 %s337, 1
      %p341 = scmp.eq.s32.totalorder %s30, 1
      %p342 = scmp.ne.s32.totalorder %s337, %s339
      %p343 = scmp.eq.s32.totalorder %s30, 0
      %p344 = por %p342, %p343
      %p345 = scmp.ne.s32.totalorder %s337, %s339
      %p346 = scmp.eq.s32.totalorder %s35, 1
      %p347 = por %p345, %p346
      %p348 = scmp.ne.s32.totalorder %s339, %s340
      %p349 = scmp.eq.s32.totalorder %s35, 0
      %p350 = por %p348, %p349
      %p351 = scmp.ne.s32.totalorder %s339, %s340
      %p352 = scmp.eq.s32.totalorder %s36, 1
      %p353 = por %p351, %p352
      %p355 = scmp.ne.s32.totalorder %s340, %s354
      %p356 = scmp.eq.s32.totalorder %s36, 0
      %p357 = por %p355, %p356
      %s359 = sadd.s32 %s358, 1
      %p362 = scmp.eq.s32.totalorder %s30, 1
      %p363 = scmp.ne.s32.totalorder %s358, %s360
      %p364 = scmp.eq.s32.totalorder %s30, 0
      %p365 = por %p363, %p364
      %p366 = scmp.ne.s32.totalorder %s358, %s360
      %p367 = scmp.eq.s32.totalorder %s35, 1
      %p368 = por %p366, %p367
      %p369 = scmp.ne.s32.totalorder %s360, %s361
      %p370 = scmp.eq.s32.totalorder %s35, 0
      %p371 = por %p369, %p370
      %p372 = scmp.ne.s32.totalorder %s360, %s361
      %p373 = scmp.eq.s32.totalorder %s36, 1
      %p374 = por %p372, %p373
      %p376 = scmp.ne.s32.totalorder %s361, %s375
      %p377 = scmp.eq.s32.totalorder %s36, 0
      %p378 = por %p376, %p377
      %s380 = sadd.s32 %s379, 1
      %p383 = scmp.eq.s32.totalorder %s30, 1
      %p384 = scmp.ne.s32.totalorder %s379, %s381
      %p385 = scmp.eq.s32.totalorder %s30, 0
      %p386 = por %p384, %p385
      %p387 = scmp.ne.s32.totalorder %s379, %s381
      %p388 = scmp.eq.s32.totalorder %s35, 1
      %p389 = por %p387, %p388
      %p390 = scmp.ne.s32.totalorder %s381, %s382
      %p391 = scmp.eq.s32.totalorder %s35, 0
      %p392 = por %p390, %p391
      %p393 = scmp.ne.s32.totalorder %s381, %s382
      %p394 = scmp.eq.s32.totalorder %s36, 1
      %p395 = por %p393, %p394
      %p397 = scmp.ne.s32.totalorder %s382, %s396
      %p398 = scmp.eq.s32.totalorder %s36, 0
      %p399 = por %p397, %p398
      %s401 = sadd.s32 %s400, 1
      %p404 = scmp.eq.s32.totalorder %s30, 1
      %p405 = scmp.ne.s32.totalorder %s400, %s402
      %p406 = scmp.eq.s32.totalorder %s30, 0
      %p407 = por %p405, %p406
      %p408 = scmp.ne.s32.totalorder %s400, %s402
      %p409 = scmp.eq.s32.totalorder %s35, 1
      %p410 = por %p408, %p409
      %p411 = scmp.ne.s32.totalorder %s402, %s403
      %p412 = scmp.eq.s32.totalorder %s35, 0
      %p413 = por %p411, %p412
      %p414 = scmp.ne.s32.totalorder %s402, %s403
      %p415 = scmp.eq.s32.totalorder %s36, 1
      %p416 = por %p414, %p415
      %p418 = scmp.ne.s32.totalorder %s403, %s417
      %p419 = scmp.eq.s32.totalorder %s36, 0
      %p420 = por %p418, %p419
      %s422 = sadd.s32 %s421, 1
      %p425 = scmp.eq.s32.totalorder %s30, 1
      %p426 = scmp.ne.s32.totalorder %s421, %s423
      %p427 = scmp.eq.s32.totalorder %s30, 0
      %p428 = por %p426, %p427
      %p429 = scmp.ne.s32.totalorder %s421, %s423
      %p430 = scmp.eq.s32.totalorder %s35, 1
      %p431 = por %p429, %p430
      %p432 = scmp.ne.s32.totalorder %s423, %s424
      %p433 = scmp.eq.s32.totalorder %s35, 0
      %p434 = por %p432, %p433
      %p435 = scmp.ne.s32.totalorder %s423, %s424
      %p436 = scmp.eq.s32.totalorder %s36, 1
      %p437 = por %p435, %p436
      %p439 = scmp.ne.s32.totalorder %s424, %s438
      %p440 = scmp.eq.s32.totalorder %s36, 0
      %p441 = por %p439, %p440
      %s443 = sadd.s32 %s442, 1
      %p446 = scmp.eq.s32.totalorder %s30, 1
      %p447 = scmp.ne.s32.totalorder %s442, %s444
      %p448 = scmp.eq.s32.totalorder %s30, 0
      %p449 = por %p447, %p448
      %p450 = scmp.ne.s32.totalorder %s442, %s444
      %p451 = scmp.eq.s32.totalorder %s35, 1
      %p452 = por %p450, %p451
      %p453 = scmp.ne.s32.totalorder %s444, %s445
      %p454 = scmp.eq.s32.totalorder %s35, 0
      %p455 = por %p453, %p454
      %p456 = scmp.ne.s32.totalorder %s444, %s445
      %p457 = scmp.eq.s32.totalorder %s36, 1
      %p458 = por %p456, %p457
      %p460 = scmp.ne.s32.totalorder %s445, %s459
      %p461 = scmp.eq.s32.totalorder %s36, 0
      %p462 = por %p460, %p461
      %s464 = sadd.s32 %s463, 1
      %p467 = scmp.eq.s32.totalorder %s30, 1
      %p468 = scmp.ne.s32.totalorder %s463, %s465
      %p469 = scmp.eq.s32.totalorder %s30, 0
      %p470 = por %p468, %p469
      %p471 = scmp.ne.s32.totalorder %s463, %s465
      %p472 = scmp.eq.s32.totalorder %s35, 1
      %p473 = por %p471, %p472
      %p474 = scmp.ne.s32.totalorder %s465, %s466
      %p475 = scmp.eq.s32.totalorder %s35, 0
      %p476 = por %p474, %p475
      %p477 = scmp.ne.s32.totalorder %s465, %s466
      %p478 = scmp.eq.s32.totalorder %s36, 1
      %p479 = por %p477, %p478
      %p481 = scmp.ne.s32.totalorder %s466, %s480
      %p482 = scmp.eq.s32.totalorder %s36, 0
      %p483 = por %p481, %p482
      %s484 = ssub.s32 %s30, %s37
      %p485 = scmp.eq.s32.totalorder %s484, 0
      %s487 = sadd.s32 %s486, 1
      %s488 = scalar_select %p485, %s486, %s487
      %p491 = pneg %p485
      %p492 = scmp.eq.s32.totalorder %s30, 1
      %p493 = por %p491, %p492
      %p494 = scmp.ne.s32.totalorder %s486, %s489
      %p495 = scmp.eq.s32.totalorder %s30, 0
      %p496 = por %p494, %p495
      %p497 = scmp.ne.s32.totalorder %s486, %s489
      %p498 = scmp.eq.s32.totalorder %s35, 1
      %p499 = por %p497, %p498
      %p500 = scmp.ne.s32.totalorder %s489, %s490
      %p501 = scmp.eq.s32.totalorder %s35, 0
      %p502 = por %p500, %p501
      %p503 = scmp.ne.s32.totalorder %s489, %s490
      %p504 = scmp.eq.s32.totalorder %s36, 1
      %p505 = por %p503, %p504
      %p507 = scmp.ne.s32.totalorder %s490, %s506
      %p508 = scmp.eq.s32.totalorder %s36, 0
      %p509 = por %p507, %p508
      %p510 = scmp.le.s32.totalorder 1, %s30
      %p511 = scmp.lt.s32.totalorder %s30, 3
      %p512 = pnand %p510, %p511
      %p513 = pneg %p512
      // Predicated region
      $region9: #{demucast_forward.1} parent=5 // pred_check
        _
      $region10: #{demucast_forward.1} parent=5 // pred_check_branch
        %515 = sbr.rel (%p512) target = $region12
      $region11: #{demucast_forward.1} parent=5 // pred_region
        %s516 = ssub.s32 %s30, 1
        // Predicated region
        $region13: #{demucast_forward.1} parent=11 // pred_check
          %p517 = pneg %p77
        $region14: #{demucast_forward.1} parent=11 // pred_check_branch
          %519 = sbr.rel (%p517) target = $region16
        $region15: #{demucast_forward.1} parent=11 // pred_region
          _
        $region16: #{demucast_forward.1} parent=11 // pred_fallthru
          _
        // Predicated region
        $region17: #{demucast_forward.1} parent=11 // pred_check
          %p520 = pneg %p98
        $region18: #{demucast_forward.1} parent=11 // pred_check_branch
          %522 = sbr.rel (%p520) target = $region20
        $region19: #{demucast_forward.1} parent=11 // pred_region
          _
        $region20: #{demucast_forward.1} parent=11 // pred_fallthru
          _
        // Predicated region
        $region21: #{demucast_forward.1} parent=11 // pred_check
          %p523 = pneg %p119
        $region22: #{demucast_forward.1} parent=11 // pred_check_branch
          %525 = sbr.rel (%p523) target = $region24
        $region23: #{demucast_forward.1} parent=11 // pred_region
          _
        $region24: #{demucast_forward.1} parent=11 // pred_fallthru
          _
        // Predicated region
        $region25: #{demucast_forward.1} parent=11 // pred_check
          %p526 = pneg %p140
        $region26: #{demucast_forward.1} parent=11 // pred_check_branch
          %528 = sbr.rel (%p526) target = $region28
        $region27: #{demucast_forward.1} parent=11 // pred_region
          _
        $region28: #{demucast_forward.1} parent=11 // pred_fallthru
          _
        // Predicated region
        $region29: #{demucast_forward.1} parent=11 // pred_check
          %p529 = pneg %p161
        $region30: #{demucast_forward.1} parent=11 // pred_check_branch
          %531 = sbr.rel (%p529) target = $region32
        $region31: #{demucast_forward.1} parent=11 // pred_region
          _
        $region32: #{demucast_forward.1} parent=11 // pred_fallthru
          _
        // Predicated region
        $region33: #{demucast_forward.1} parent=11 // pred_check
          %p532 = pneg %p182
        $region34: #{demucast_forward.1} parent=11 // pred_check_branch
          %534 = sbr.rel (%p532) target = $region36
        $region35: #{demucast_forward.1} parent=11 // pred_region
          _
        $region36: #{demucast_forward.1} parent=11 // pred_fallthru
          _
        // Predicated region
        $region37: #{demucast_forward.1} parent=11 // pred_check
          %p535 = pneg %p203
        $region38: #{demucast_forward.1} parent=11 // pred_check_branch
          %537 = sbr.rel (%p535) target = $region40
        $region39: #{demucast_forward.1} parent=11 // pred_region
          _
        $region40: #{demucast_forward.1} parent=11 // pred_fallthru
          _
        // Predicated region
        $region41: #{demucast_forward.1} parent=11 // pred_check
          %p538 = pneg %p224
        $region42: #{demucast_forward.1} parent=11 // pred_check_branch
          %540 = sbr.rel (%p538) target = $region44
        $region43: #{demucast_forward.1} parent=11 // pred_region
          _
        $region44: #{demucast_forward.1} parent=11 // pred_fallthru
          _
        // Predicated region
        $region45: #{demucast_forward.1} parent=11 // pred_check
          %p541 = pneg %p245
        $region46: #{demucast_forward.1} parent=11 // pred_check_branch
          %543 = sbr.rel (%p541) target = $region48
        $region47: #{demucast_forward.1} parent=11 // pred_region
          _
        $region48: #{demucast_forward.1} parent=11 // pred_fallthru
          _
        // Predicated region
        $region49: #{demucast_forward.1} parent=11 // pred_check
          %p544 = pneg %p266
        $region50: #{demucast_forward.1} parent=11 // pred_check_branch
          %546 = sbr.rel (%p544) target = $region52
        $region51: #{demucast_forward.1} parent=11 // pred_region
          _
        $region52: #{demucast_forward.1} parent=11 // pred_fallthru
          _
        // Predicated region
        $region53: #{demucast_forward.1} parent=11 // pred_check
          %p547 = pneg %p287
        $region54: #{demucast_forward.1} parent=11 // pred_check_branch
          %549 = sbr.rel (%p547) target = $region56
        $region55: #{demucast_forward.1} parent=11 // pred_region
          _
        $region56: #{demucast_forward.1} parent=11 // pred_fallthru
          _
        // Predicated region
        $region57: #{demucast_forward.1} parent=11 // pred_check
          %p550 = pneg %p308
        $region58: #{demucast_forward.1} parent=11 // pred_check_branch
          %552 = sbr.rel (%p550) target = $region60
        $region59: #{demucast_forward.1} parent=11 // pred_region
          _
        $region60: #{demucast_forward.1} parent=11 // pred_fallthru
          _
        // Predicated region
        $region61: #{demucast_forward.1} parent=11 // pred_check
          %p553 = pneg %p329
        $region62: #{demucast_forward.1} parent=11 // pred_check_branch
          %555 = sbr.rel (%p553) target = $region64
        $region63: #{demucast_forward.1} parent=11 // pred_region
          _
        $region64: #{demucast_forward.1} parent=11 // pred_fallthru
          _
        // Predicated region
        $region65: #{demucast_forward.1} parent=11 // pred_check
          %p556 = pneg %p350
        $region66: #{demucast_forward.1} parent=11 // pred_check_branch
          %558 = sbr.rel (%p556) target = $region68
        $region67: #{demucast_forward.1} parent=11 // pred_region
          _
        $region68: #{demucast_forward.1} parent=11 // pred_fallthru
          _
        // Predicated region
        $region69: #{demucast_forward.1} parent=11 // pred_check
          %p559 = pneg %p371
        $region70: #{demucast_forward.1} parent=11 // pred_check_branch
          %561 = sbr.rel (%p559) target = $region72
        $region71: #{demucast_forward.1} parent=11 // pred_region
          _
        $region72: #{demucast_forward.1} parent=11 // pred_fallthru
          _
        // Predicated region
        $region73: #{demucast_forward.1} parent=11 // pred_check
          %p562 = pneg %p392
        $region74: #{demucast_forward.1} parent=11 // pred_check_branch
          %564 = sbr.rel (%p562) target = $region76
        $region75: #{demucast_forward.1} parent=11 // pred_region
          _
        $region76: #{demucast_forward.1} parent=11 // pred_fallthru
          _
        // Predicated region
        $region77: #{demucast_forward.1} parent=11 // pred_check
          %p565 = pneg %p413
        $region78: #{demucast_forward.1} parent=11 // pred_check_branch
          %567 = sbr.rel (%p565) target = $region80
        $region79: #{demucast_forward.1} parent=11 // pred_region
          _
        $region80: #{demucast_forward.1} parent=11 // pred_fallthru
          _
        // Predicated region
        $region81: #{demucast_forward.1} parent=11 // pred_check
          %p568 = pneg %p434
        $region82: #{demucast_forward.1} parent=11 // pred_check_branch
          %570 = sbr.rel (%p568) target = $region84
        $region83: #{demucast_forward.1} parent=11 // pred_region
          _
        $region84: #{demucast_forward.1} parent=11 // pred_fallthru
          _
        // Predicated region
        $region85: #{demucast_forward.1} parent=11 // pred_check
          %p571 = pneg %p455
        $region86: #{demucast_forward.1} parent=11 // pred_check_branch
          %573 = sbr.rel (%p571) target = $region88
        $region87: #{demucast_forward.1} parent=11 // pred_region
          _
        $region88: #{demucast_forward.1} parent=11 // pred_fallthru
          _
        // Predicated region
        $region89: #{demucast_forward.1} parent=11 // pred_check
          %p574 = pneg %p476
        $region90: #{demucast_forward.1} parent=11 // pred_check_branch
          %576 = sbr.rel (%p574) target = $region92
        $region91: #{demucast_forward.1} parent=11 // pred_region
          _
        $region92: #{demucast_forward.1} parent=11 // pred_fallthru
          _
      $region12: #{demucast_forward.1} parent=5 // pred_fallthru
        _
      %p577 = scmp.lt.s32.totalorder %s30, 2
      // Predicated region
      $region93: #{demucast_forward.1} parent=5 // pred_check
        %p578 = pneg %p577
      $region94: #{demucast_forward.1} parent=5 // pred_check_branch
        %580 = sbr.rel (%p578) target = $region96
      $region95: #{demucast_forward.1} parent=5 // pred_region
        // Predicated region
        $region97: #{demucast_forward.1} parent=95 // pred_check
          %p581 = pneg %p50
        $region98: #{demucast_forward.1} parent=95 // pred_check_branch
          %583 = sbr.rel (%p581) target = $region100
        $region99: #{demucast_forward.1} parent=95 // pred_region
          %p584 = scmp.lt.s32.totalorder %s30, 1
          %s585 = scalar_select %p584, %s30, 1
          %s586 = smul.addr %s585, 8
          %s587 = scalar_lea.vmem %s0, %s586
        $region100: #{demucast_forward.1} parent=95 // pred_fallthru
          _
      $region96: #{demucast_forward.1} parent=5 // pred_fallthru
        _
      %p588 = scmp.le.s32.totalorder 1, %s30
      %p589 = scmp.lt.s32.totalorder %s30, 3
      %p590 = pnand %p588, %p589
      %p591 = pneg %p590
      // Predicated region
      $region101: #{demucast_forward.1} parent=5 // pred_check
        _
      $region102: #{demucast_forward.1} parent=5 // pred_check_branch
        %593 = sbr.rel (%p590) target = $region104
      $region103: #{demucast_forward.1} parent=5 // pred_region
        %s594 = ssub.s32 %s30, 1
        %p595 = scmp.lt.s32.totalorder %s35, 1
        %s596 = scalar_select %p595, %s35, 1
        %s597 = smul.addr %s596, 8
        %s598 = scalar_lea.vmem %s0, %s597
        %p599 = pneg %p56
        %p600 = pneg %p53
        %p601 = pneg %p77
        %p602 = pneg %p74
        %p603 = pneg %p98
        %p604 = pneg %p95
        %p605 = pneg %p119
        %p606 = pneg %p116
        %p607 = pneg %p140
        %p608 = pneg %p137
        %p609 = pneg %p161
        %p610 = pneg %p158
        %p611 = pneg %p182
        %p612 = pneg %p179
        %p613 = pneg %p203
        %p614 = pneg %p200
        %p615 = pneg %p224
        %p616 = pneg %p221
        %p617 = pneg %p245
        %p618 = pneg %p242
        %p619 = pneg %p266
        %p620 = pneg %p263
        %p621 = pneg %p287
        %p622 = pneg %p284
        %p623 = pneg %p308
        %p624 = pneg %p305
        %p625 = pneg %p329
        %p626 = pneg %p326
        %p627 = pneg %p350
        %p628 = pneg %p347
        %p629 = pneg %p371
        %p630 = pneg %p368
        %p631 = pneg %p392
        %p632 = pneg %p389
        %p633 = pneg %p413
        %p634 = pneg %p410
        %p635 = pneg %p434
        %p636 = pneg %p431
        %p637 = pneg %p455
        %p638 = pneg %p452
        %p639 = pneg %p476
        %p640 = pneg %p473
        %p641 = pneg %p502
        %p642 = pneg %p499
        %s643 = sand.u32 %s489, 1
        %s644 = scalar_lea.sflag [#allocation3], %s643
        %s645 = sand.u32 %s489, 1
        %s646 = scalar_lea.vmem [#allocation2], %s645
        %p647 = scmp.lt.s32.totalorder %s35, 1
        %s648 = scalar_select %p647, %s35, 1
        %s649 = smul.addr %s648, 8
        %s650 = scalar_lea.vmem %s0, %s649
        %v651 = vld [vmem:[%s650] sm:$0x3f]
        %v652 = vld [vmem:[%s2] sm:$0xff]
        %v653 = vld [vmem:[%s2 + $0x8] sm:$0xff]
        %v654 = vld [vmem:[%s2 + $0x10] sm:$0xff]
        %v655 = vld [vmem:[%s2 + $0x18] sm:$0xff]
        %v656 = vld [vmem:[%s2 + $0x20] sm:$0xff]
        %v657 = vld [vmem:[%s2 + $0x28] sm:$0xff]
        %v658 = vld [vmem:[%s2 + $0x30] sm:$0xff]
        %v659 = vld [vmem:[%s2 + $0x38] sm:$0xff]
        %v660 = vld [vmem:[%s1] sm:$0x3f]
        %vm661 = vcmask 523264
        %v663 = vsel %vm661, %v651, 0
        %665 = vmatpush.msra.mxu0 0.0
        %666 = vmatpush.msra.mxu0 0.0
        %667 = vmatpush.msra.mxu0 0.0
        %668 = vmatpush.msra.mxu0 0.0
        %669 = vmatpush.msra.mxu0 0.0
        %670 = vmatpush.msra.mxu0 0.0
        %671 = vmatpush.msra.mxu0 0.0
        %672 = vmatpush.msra.mxu0 0.0
        %673 = vmatpush.msra.mxu0 %v659
        %674 = vmatpush.msra.mxu0 %v658
        %675 = vmatpush.msra.mxu0 %v657
        %676 = vmatpush.msra.mxu0 %v656
        %677 = vmatpush.msra.mxu0 %v655
        %678 = vmatpush.msra.mxu0 %v654
        %679 = vmatpush.msra.mxu0 %v653
        %680 = vmatpush.msra.mxu0 %v652
        %681 = vmatmul.f32.gmra.mxu0 %v663
        %v682 = vpop.f32.mrf.mxu0
        %v683 = vadd.f32 %v660, %v682
        %684 = vdwg.mxu0
        %v685 = vld [vmem:[%s3] sm:$0x1]
        %v686 = vld [vmem:[%s4] sm:$0x1]
        %vm687 = vcmask 259072
        %v688 = vsel %vm687, %v683, 0.0
        %689 = vadd.xlane.f32.xlu0 %v688
        %v690 = vpop.xlane.xlu0 %689
        %v691 = vrcp.pop 32.0
        %v692 = vmul.f32 32.0, %v691
        %v693 = vsub.f32 1.0, %v692
        %v694 = vmul.f32 %v691, %v693
        %v695 = vadd.f32 %v691, %v694
        %vm696 = vweird.f32 %v691
        %v697 = vsel %vm696, %v691, %v695
        %v698 = vmul.f32 %v690, %v697
        %v699 = vsub.f32 %v683, %v698
        %v700 = vmul.f32 %v699, %v699
        %v701 = vsel %vm687, %v700, 0.0
        %702 = vadd.xlane.f32.xlu0 %v701
        %v703 = vpop.xlane.xlu0 %702
        %v704 = vmul.f32 %v703, %v697
        %v705 = vadd.f32 %v704, 1e-06
        %v706 = vrsqrt.pop %v705
        %v707 = vmul.f32 %v706, %v705
        %v708 = vmul.f32 %v707, %v706
        %v709 = vmul.f32 0.5, %v708
        %v710 = vsub.f32 1.5, %v709
        %v711 = vmul.f32 %v706, %v710
        %vm712 = vweird.f32 %v705
        %vm713 = vweird.f32 %v706
        %vm714 = vmor %vm712, %vm713
        %v715 = vsel %vm714, %v706, %v711
        %v716 = vmul.f32 %v699, %v715
        %v718 = vperm.slane %v685, 0
        %v720 = vmul.f32 %v716, %v718
        %v722 = vperm.slane %v686, 0
        %v724 = vadd.f32 %v720, %v722
        %v725 = vld [vmem:[%s5] sm:$0xff]
        %v726 = vld [vmem:[%s5 + $0x8] sm:$0xff]
        %v727 = vld [vmem:[%s5 + $0x10] sm:$0xff]
        %v728 = vld [vmem:[%s5 + $0x18] sm:$0xff]
        %v729 = vld [vmem:[%s6] sm:$0x1]
        %v731 = vperm.slane %v729, 0
        %vm733 = vcmask 261120
        %v735 = vsel %vm733, %v724, 0
        %737 = vmatpush.msra.mxu0 0.0
        %738 = vmatpush.msra.mxu0 0.0
        %739 = vmatpush.msra.mxu0 0.0
        %740 = vmatpush.msra.mxu0 0.0
        %741 = vmatpush.msra.mxu0 0.0
        %742 = vmatpush.msra.mxu0 0.0
        %743 = vmatpush.msra.mxu0 0.0
        %744 = vmatpush.msra.mxu0 0.0
        %745 = vmatpush.msra.mxu0 0.0
        %746 = vmatpush.msra.mxu0 0.0
        %747 = vmatpush.msra.mxu0 0.0
        %748 = vmatpush.msra.mxu0 0.0
        %749 = vmatpush.msra.mxu0 %v728
        %750 = vmatpush.msra.mxu0 %v727
        %751 = vmatpush.msra.mxu0 %v726
        %752 = vmatpush.msra.mxu0 %v725
        %753 = vmatmul.f32.gmra.mxu0 %v735
        %v754 = vpop.f32.mrf.mxu0
        %v755 = vadd.f32 %v731, %v754
        %756 = vdwg.mxu0
        %v757 = vld [vmem:[%s7] sm:$0xff]
        %v758 = vld [vmem:[%s7 + $0x8] sm:$0xff]
        %v759 = vld [vmem:[%s7 + $0x10] sm:$0xff]
        %v760 = vld [vmem:[%s7 + $0x18] sm:$0xff]
        %762 = vrot.lane.b32.xlu0 %v755, 96
        %v763 = vpop.permute.xlu0 %762
        %vm764 = vcmask 64512
        %v765 = vsel %vm764, %v755, 0
        %v767 = vsel %vm764, %v763, 0
        %769 = vmatpush.xpose.msra.mxu0 0.0
        %770 = vmatpush.xpose.msra.mxu0 0.0
        %771 = vmatpush.xpose.msra.mxu0 0.0
        %772 = vmatpush.xpose.msra.mxu0 0.0
        %773 = vmatpush.xpose.msra.mxu0 0.0
        %774 = vmatpush.xpose.msra.mxu0 0.0
        %775 = vmatpush.xpose.msra.mxu0 0.0
        %776 = vmatpush.xpose.msra.mxu0 0.0
        %777 = vmatpush.xpose.msra.mxu0 0.0
        %778 = vmatpush.xpose.msra.mxu0 0.0
        %779 = vmatpush.xpose.msra.mxu0 0.0
        %780 = vmatpush.xpose.msra.mxu0 0.0
        %781 = vmatpush.xpose.msra.mxu0 0.0
        %782 = vmatpush.xpose.msra.mxu0 0.0
        %783 = vmatpush.xpose.msra.mxu0 0.0
        %784 = vmatpush.xpose.msra.mxu0 %v767
        %785 = vmatmul.f32.gmra.mxu0 %v765
        %v786 = vpop.f32.mrf.mxu0
        %v787 = vadd.f32 0.0, %v786
        %788 = vdwg.mxu0
        %v789 = vmul.f32 %v787, 0.35355338
        %vm790 = vcmask 46080
        %v791 = vsel %vm790, %v789, -inf
        %792 = vmax.xlane.f32.xlu0 %v791
        %v793 = vpop.xlane.xlu0 %792
        %v794 = vsub.f32 %v789, %v793
        %v795 = vmul.f32 %v794, 1.442695
        %v796 = vpow.pop %v795
        %v797 = vsel %vm790, %v796, 0.0
        %798 = vadd.xlane.f32.xlu0 %v797
        %v799 = vpop.xlane.xlu0 %798
        %v800 = vrcp.pop %v799
        %v801 = vmul.f32 %v796, %v800
        %802 = vrot.lane.b32.xlu0 %v755, 64
        %v803 = vpop.permute.xlu0 %802
        %vm804 = vcmask 48128
        %v806 = vsel %vm804, %v801, 0
        %vm808 = vcmask 1045504
        %v809 = vsel %vm808, %v803, 0
        %811 = vmatpush.msra.mxu0 0.0
        %812 = vmatpush.msra.mxu0 0.0
        %813 = vmatpush.msra.mxu0 0.0
        %814 = vmatpush.msra.mxu0 0.0
        %815 = vmatpush.msra.mxu0 0.0
        %816 = vmatpush.msra.mxu0 0.0
        %817 = vmatpush.msra.mxu0 0.0
        %818 = vmatpush.msra.mxu0 0.0
        %819 = vmatpush.msra.mxu0 0.0
        %820 = vmatpush.msra.mxu0 0.0
        %821 = vmatpush.msra.mxu0 0.0
        %822 = vmatpush.msra.mxu0 0.0
        %823 = vmatpush.msra.mxu0 0.0
        %824 = vmatpush.msra.mxu0 0.0
        %825 = vmatpush.msra.mxu0 0.0
        %826 = vmatpush.msra.mxu0 %v809
        %827 = vmatmul.f32.gmra.mxu0 %v806
        %v828 = vpop.f32.mrf.mxu0
        %v829 = vadd.f32 0.0, %v828
        %830 = vdwg.mxu0
        %831 = vrot.lane.b32.xlu0 %v755, 120
        %v832 = vpop.permute.xlu0 %831
        %833 = vrot.lane.b32.xlu0 %v755, 88
        %v834 = vpop.permute.xlu0 %833
        %v835 = vsel %vm764, %v832, 0
        %v837 = vsel %vm764, %v834, 0
        %839 = vmatpush.xpose.msra.mxu0 0.0
        %840 = vmatpush.xpose.msra.mxu0 0.0
        %841 = vmatpush.xpose.msra.mxu0 0.0
        %842 = vmatpush.xpose.msra.mxu0 0.0
        %843 = vmatpush.xpose.msra.mxu0 0.0
        %844 = vmatpush.xpose.msra.mxu0 0.0
        %845 = vmatpush.xpose.msra.mxu0 0.0
        %846 = vmatpush.xpose.msra.mxu0 0.0
        %847 = vmatpush.xpose.msra.mxu0 0.0
        %848 = vmatpush.xpose.msra.mxu0 0.0
        %849 = vmatpush.xpose.msra.mxu0 0.0
        %850 = vmatpush.xpose.msra.mxu0 0.0
        %851 = vmatpush.xpose.msra.mxu0 0.0
        %852 = vmatpush.xpose.msra.mxu0 0.0
        %853 = vmatpush.xpose.msra.mxu0 0.0
        %854 = vmatpush.xpose.msra.mxu0 %v837
        %855 = vmatmul.f32.gmra.mxu0 %v835
        %v856 = vpop.f32.mrf.mxu0
        %v857 = vadd.f32 0.0, %v856
        %858 = vdwg.mxu0
        %v859 = vmul.f32 %v857, 0.35355338
        %v860 = vsel %vm790, %v859, -inf
        %861 = vmax.xlane.f32.xlu0 %v860
        %v862 = vpop.xlane.xlu0 %861
        %v863 = vsub.f32 %v859, %v862
        %v864 = vmul.f32 %v863, 1.442695
        %v865 = vpow.pop %v864
        %v866 = vsel %vm790, %v865, 0.0
        %867 = vadd.xlane.f32.xlu0 %v866
        %v868 = vpop.xlane.xlu0 %867
        %v869 = vrcp.pop %v868
        %v870 = vmul.f32 %v865, %v869
        %871 = vrot.lane.b32.xlu0 %v755, 56
        %v872 = vpop.permute.xlu0 %871
        %v874 = vsel %vm804, %v870, 0
        %v876 = vsel %vm808, %v872, 0
        %878 = vmatpush.msra.mxu0 0.0
        %879 = vmatpush.msra.mxu0 0.0
        %880 = vmatpush.msra.mxu0 0.0
        %881 = vmatpush.msra.mxu0 0.0
        %882 = vmatpush.msra.mxu0 0.0
        %883 = vmatpush.msra.mxu0 0.0
        %884 = vmatpush.msra.mxu0 0.0
        %885 = vmatpush.msra.mxu0 0.0
        %886 = vmatpush.msra.mxu0 0.0
        %887 = vmatpush.msra.mxu0 0.0
        %888 = vmatpush.msra.mxu0 0.0
        %889 = vmatpush.msra.mxu0 0.0
        %890 = vmatpush.msra.mxu0 0.0
        %891 = vmatpush.msra.mxu0 0.0
        %892 = vmatpush.msra.mxu0 0.0
        %893 = vmatpush.msra.mxu0 %v876
        %894 = vmatmul.f32.gmra.mxu0 %v874
        %v895 = vpop.f32.mrf.mxu0
        %v896 = vadd.f32 0.0, %v895
        %897 = vdwg.mxu0
        %v899 = vsel %vm764, %v896, 0
        %901 = vmatpush.msra.mxu0 0.0
        %902 = vmatpush.msra.mxu0 0.0
        %903 = vmatpush.msra.mxu0 0.0
        %904 = vmatpush.msra.mxu0 0.0
        %905 = vmatpush.msra.mxu0 0.0
        %906 = vmatpush.msra.mxu0 0.0
        %907 = vmatpush.msra.mxu0 0.0
        %908 = vmatpush.msra.mxu0 0.0
        %909 = vmatpush.msra.mxu0 0.0
        %910 = vmatpush.msra.mxu0 0.0
        %911 = vmatpush.msra.mxu0 0.0
        %912 = vmatpush.msra.mxu0 0.0
        %913 = vmatpush.msra.mxu0 0.0
        %914 = vmatpush.msra.mxu0 0.0
        %915 = vmatpush.msra.mxu0 0.0
        %916 = vmatpush.msra.mxu0 %v758
        %917 = vmatmul.f32.gmra.mxu0 %v899
        %v918 = vpop.f32.mrf.mxu0
        %v919 = vadd.f32 0.0, %v918
        %920 = vdwg.mxu0
        %v922 = vsel %vm764, %v829, 0
        %924 = vmatpush.msra.mxu0 0.0
        %925 = vmatpush.msra.mxu0 0.0
        %926 = vmatpush.msra.mxu0 0.0
        %927 = vmatpush.msra.mxu0 0.0
        %928 = vmatpush.msra.mxu0 0.0
        %929 = vmatpush.msra.mxu0 0.0
        %930 = vmatpush.msra.mxu0 0.0
        %931 = vmatpush.msra.mxu0 0.0
        %932 = vmatpush.msra.mxu0 0.0
        %933 = vmatpush.msra.mxu0 0.0
        %934 = vmatpush.msra.mxu0 0.0
        %935 = vmatpush.msra.mxu0 0.0
        %936 = vmatpush.msra.mxu0 0.0
        %937 = vmatpush.msra.mxu0 0.0
        %938 = vmatpush.msra.mxu0 0.0
        %939 = vmatpush.msra.mxu0 %v757
        %940 = vmatmul.f32.gmra.mxu0 %v922
        %v941 = vpop.f32.mrf.mxu0
        %v942 = vadd.f32 %v919, %v941
        %943 = vdwg.mxu0
        %944 = vrot.lane.b32.xlu0 %v755, 112
        %v945 = vpop.permute.xlu0 %944
        %946 = vrot.lane.b32.xlu0 %v755, 80
        %v947 = vpop.permute.xlu0 %946
        %v948 = vsel %vm764, %v945, 0
        %v950 = vsel %vm764, %v947, 0
        %952 = vmatpush.xpose.msra.mxu0 0.0
        %953 = vmatpush.xpose.msra.mxu0 0.0
        %954 = vmatpush.xpose.msra.mxu0 0.0
        %955 = vmatpush.xpose.msra.mxu0 0.0
        %956 = vmatpush.xpose.msra.mxu0 0.0
        %957 = vmatpush.xpose.msra.mxu0 0.0
        %958 = vmatpush.xpose.msra.mxu0 0.0
        %959 = vmatpush.xpose.msra.mxu0 0.0
        %960 = vmatpush.xpose.msra.mxu0 0.0
        %961 = vmatpush.xpose.msra.mxu0 0.0
        %962 = vmatpush.xpose.msra.mxu0 0.0
        %963 = vmatpush.xpose.msra.mxu0 0.0
        %964 = vmatpush.xpose.msra.mxu0 0.0
        %965 = vmatpush.xpose.msra.mxu0 0.0
        %966 = vmatpush.xpose.msra.mxu0 0.0
        %967 = vmatpush.xpose.msra.mxu0 %v950
        %968 = vmatmul.f32.gmra.mxu0 %v948
        %v969 = vpop.f32.mrf.mxu0
        %v970 = vadd.f32 0.0, %v969
        %971 = vdwg.mxu0
        %v972 = vmul.f32 %v970, 0.35355338
        %v973 = vsel %vm790, %v972, -inf
        %974 = vmax.xlane.f32.xlu0 %v973
        %v975 = vpop.xlane.xlu0 %974
        %v976 = vsub.f32 %v972, %v975
        %v977 = vmul.f32 %v976, 1.442695
        %v978 = vpow.pop %v977
        %v979 = vsel %vm790, %v978, 0.0
        %980 = vadd.xlane.f32.xlu0 %v979
        %v981 = vpop.xlane.xlu0 %980
        %v982 = vrcp.pop %v981
        %v983 = vmul.f32 %v978, %v982
        %984 = vrot.lane.b32.xlu0 %v755, 48
        %v985 = vpop.permute.xlu0 %984
        %v987 = vsel %vm804, %v983, 0
        %v989 = vsel %vm808, %v985, 0
        %991 = vmatpush.msra.mxu0 0.0
        %992 = vmatpush.msra.mxu0 0.0
        %993 = vmatpush.msra.mxu0 0.0
        %994 = vmatpush.msra.mxu0 0.0
        %995 = vmatpush.msra.mxu0 0.0
        %996 = vmatpush.msra.mxu0 0.0
        %997 = vmatpush.msra.mxu0 0.0
        %998 = vmatpush.msra.mxu0 0.0
        %999 = vmatpush.msra.mxu0 0.0
        %1000 = vmatpush.msra.mxu0 0.0
        %1001 = vmatpush.msra.mxu0 0.0
        %1002 = vmatpush.msra.mxu0 0.0
        %1003 = vmatpush.msra.mxu0 0.0
        %1004 = vmatpush.msra.mxu0 0.0
        %1005 = vmatpush.msra.mxu0 0.0
        %1006 = vmatpush.msra.mxu0 %v989
        %1007 = vmatmul.f32.gmra.mxu0 %v987
        %v1008 = vpop.f32.mrf.mxu0
        %v1009 = vadd.f32 0.0, %v1008
        %1010 = vdwg.mxu0
        %v1012 = vsel %vm764, %v1009, 0
        %1014 = vmatpush.msra.mxu0 0.0
        %1015 = vmatpush.msra.mxu0 0.0
        %1016 = vmatpush.msra.mxu0 0.0
        %1017 = vmatpush.msra.mxu0 0.0
        %1018 = vmatpush.msra.mxu0 0.0
        %1019 = vmatpush.msra.mxu0 0.0
        %1020 = vmatpush.msra.mxu0 0.0
        %1021 = vmatpush.msra.mxu0 0.0
        %1022 = vmatpush.msra.mxu0 0.0
        %1023 = vmatpush.msra.mxu0 0.0
        %1024 = vmatpush.msra.mxu0 0.0
        %1025 = vmatpush.msra.mxu0 0.0
        %1026 = vmatpush.msra.mxu0 0.0
        %1027 = vmatpush.msra.mxu0 0.0
        %1028 = vmatpush.msra.mxu0 0.0
        %1029 = vmatpush.msra.mxu0 %v759
        %1030 = vmatmul.f32.gmra.mxu0 %v1012
        %v1031 = vpop.f32.mrf.mxu0
        %v1032 = vadd.f32 0.0, %v1031
        %1033 = vdwg.mxu0
        %v1034 = vadd.f32 %v942, %v1032
        %1035 = vrot.lane.b32.xlu0 %v755, 104
        %v1036 = vpop.permute.xlu0 %1035
        %1037 = vrot.lane.b32.xlu0 %v755, 72
        %v1038 = vpop.permute.xlu0 %1037
        %v1039 = vsel %vm764, %v1036, 0
        %v1041 = vsel %vm764, %v1038, 0
        %1043 = vmatpush.xpose.msra.mxu0 0.0
        %1044 = vmatpush.xpose.msra.mxu0 0.0
        %1045 = vmatpush.xpose.msra.mxu0 0.0
        %1046 = vmatpush.xpose.msra.mxu0 0.0
        %1047 = vmatpush.xpose.msra.mxu0 0.0
        %1048 = vmatpush.xpose.msra.mxu0 0.0
        %1049 = vmatpush.xpose.msra.mxu0 0.0
        %1050 = vmatpush.xpose.msra.mxu0 0.0
        %1051 = vmatpush.xpose.msra.mxu0 0.0
        %1052 = vmatpush.xpose.msra.mxu0 0.0
        %1053 = vmatpush.xpose.msra.mxu0 0.0
        %1054 = vmatpush.xpose.msra.mxu0 0.0
        %1055 = vmatpush.xpose.msra.mxu0 0.0
        %1056 = vmatpush.xpose.msra.mxu0 0.0
        %1057 = vmatpush.xpose.msra.mxu0 0.0
        %1058 = vmatpush.xpose.msra.mxu0 %v1041
        %1059 = vmatmul.f32.gmra.mxu0 %v1039
        %v1060 = vpop.f32.mrf.mxu0
        %v1061 = vadd.f32 0.0, %v1060
        %1062 = vdwg.mxu0
        %v1063 = vmul.f32 %v1061, 0.35355338
        %v1064 = vsel %vm790, %v1063, -inf
        %1065 = vmax.xlane.f32.xlu0 %v1064
        %v1066 = vpop.xlane.xlu0 %1065
        %v1067 = vsub.f32 %v1063, %v1066
        %v1068 = vmul.f32 %v1067, 1.442695
        %v1069 = vpow.pop %v1068
        %v1070 = vsel %vm790, %v1069, 0.0
        %1071 = vadd.xlane.f32.xlu0 %v1070
        %v1072 = vpop.xlane.xlu0 %1071
        %v1073 = vrcp.pop %v1072
        %v1074 = vmul.f32 %v1069, %v1073
        %1075 = vrot.lane.b32.xlu0 %v755, 40
        %v1076 = vpop.permute.xlu0 %1075
        %v1078 = vsel %vm804, %v1074, 0
        %v1080 = vsel %vm808, %v1076, 0
        %1082 = vmatpush.msra.mxu0 0.0
        %1083 = vmatpush.msra.mxu0 0.0
        %1084 = vmatpush.msra.mxu0 0.0
        %1085 = vmatpush.msra.mxu0 0.0
        %1086 = vmatpush.msra.mxu0 0.0
        %1087 = vmatpush.msra.mxu0 0.0
        %1088 = vmatpush.msra.mxu0 0.0
        %1089 = vmatpush.msra.mxu0 0.0
        %1090 = vmatpush.msra.mxu0 0.0
        %1091 = vmatpush.msra.mxu0 0.0
        %1092 = vmatpush.msra.mxu0 0.0
        %1093 = vmatpush.msra.mxu0 0.0
        %1094 = vmatpush.msra.mxu0 0.0
        %1095 = vmatpush.msra.mxu0 0.0
        %1096 = vmatpush.msra.mxu0 0.0
        %1097 = vmatpush.msra.mxu0 %v1080
        %1098 = vmatmul.f32.gmra.mxu0 %v1078
        %v1099 = vpop.f32.mrf.mxu0
        %v1100 = vadd.f32 0.0, %v1099
        %1101 = vdwg.mxu0
        %v1103 = vsel %vm764, %v1100, 0
        %1105 = vmatpush.msra.mxu0 0.0
        %1106 = vmatpush.msra.mxu0 0.0
        %1107 = vmatpush.msra.mxu0 0.0
        %1108 = vmatpush.msra.mxu0 0.0
        %1109 = vmatpush.msra.mxu0 0.0
        %1110 = vmatpush.msra.mxu0 0.0
        %1111 = vmatpush.msra.mxu0 0.0
        %1112 = vmatpush.msra.mxu0 0.0
        %1113 = vmatpush.msra.mxu0 0.0
        %1114 = vmatpush.msra.mxu0 0.0
        %1115 = vmatpush.msra.mxu0 0.0
        %1116 = vmatpush.msra.mxu0 0.0
        %1117 = vmatpush.msra.mxu0 0.0
        %1118 = vmatpush.msra.mxu0 0.0
        %1119 = vmatpush.msra.mxu0 0.0
        %1120 = vmatpush.msra.mxu0 %v760
        %1121 = vmatmul.f32.gmra.mxu0 %v1103
        %v1122 = vpop.f32.mrf.mxu0
        %v1123 = vadd.f32 0.0, %v1122
        %1124 = vdwg.mxu0
        %v1125 = vadd.f32 %v1034, %v1123
        %v1126 = vadd.f32 %v683, %v1125
        %v1127 = vld [vmem:[%s8] sm:$0x1]
        %v1129 = vperm.slane %v1127, 0
        %v1131 = vadd.f32 %v1126, %v1129
        %v1132 = vld [vmem:[%s9] sm:$0x1]
        %v1133 = vld [vmem:[%s10] sm:$0x1]
        %v1134 = vsel %vm687, %v1131, 0.0
        %1135 = vadd.xlane.f32.xlu0 %v1134
        %v1136 = vpop.xlane.xlu0 %1135
        %v1137 = vmul.f32 %v1136, %v697
        %v1138 = vsub.f32 %v1131, %v1137
        %v1139 = vmul.f32 %v1138, %v1138
        %v1140 = vsel %vm687, %v1139, 0.0
        %1141 = vadd.xlane.f32.xlu0 %v1140
        %v1142 = vpop.xlane.xlu0 %1141
        %v1143 = vmul.f32 %v1142, %v697
        %v1144 = vadd.f32 %v1143, 1e-06
        %v1145 = vrsqrt.pop %v1144
        %v1146 = vmul.f32 %v1145, %v1144
        %v1147 = vmul.f32 %v1146, %v1145
        %v1148 = vmul.f32 0.5, %v1147
        %v1149 = vsub.f32 1.5, %v1148
        %v1150 = vmul.f32 %v1145, %v1149
        %vm1151 = vweird.f32 %v1144
        %vm1152 = vweird.f32 %v1145
        %vm1153 = vmor %vm1151, %vm1152
        %v1154 = vsel %vm1153, %v1145, %v1150
        %v1155 = vmul.f32 %v1138, %v1154
        %v1157 = vperm.slane %v1132, 0
        %v1159 = vmul.f32 %v1155, %v1157
        %v1161 = vperm.slane %v1133, 0
        %v1163 = vadd.f32 %v1159, %v1161
        %v1164 = vld [vmem:[%s11] sm:$0xff]
        %v1165 = vld [vmem:[%s11 + $0x8] sm:$0xff]
        %v1166 = vld [vmem:[%s11 + $0x10] sm:$0xff]
        %v1167 = vld [vmem:[%s11 + $0x18] sm:$0xff]
        %v1168 = vld [vmem:[%s12] sm:$0x1]
        %v1170 = vperm.slane %v1168, 0
        %v1173 = vsel %vm733, %v1163, 0
        %1175 = vmatpush.msra.mxu0 0.0
        %1176 = vmatpush.msra.mxu0 0.0
        %1177 = vmatpush.msra.mxu0 0.0
        %1178 = vmatpush.msra.mxu0 0.0
        %1179 = vmatpush.msra.mxu0 0.0
        %1180 = vmatpush.msra.mxu0 0.0
        %1181 = vmatpush.msra.mxu0 0.0
        %1182 = vmatpush.msra.mxu0 0.0
        %1183 = vmatpush.msra.mxu0 0.0
        %1184 = vmatpush.msra.mxu0 0.0
        %1185 = vmatpush.msra.mxu0 0.0
        %1186 = vmatpush.msra.mxu0 0.0
        %1187 = vmatpush.msra.mxu0 %v1167
        %1188 = vmatpush.msra.mxu0 %v1166
        %1189 = vmatpush.msra.mxu0 %v1165
        %1190 = vmatpush.msra.mxu0 %v1164
        %1191 = vmatmul.f32.gmra.mxu0 %v1173
        %v1192 = vpop.f32.mrf.mxu0
        %v1193 = vadd.f32 %v1170, %v1192
        %1194 = vdwg.mxu0
        %v1195 = vmul.f32 %v1193, %v1193
        %v1196 = vmul.f32 %v1193, %v1195
        %v1197 = vmul.f32 %v1196, 0.044715
        %v1198 = vadd.f32 %v1193, %v1197
        %v1199 = vmul.f32 %v1198, 0.7978846
        %v1200 = vtanh.pop %v1199
        %v1201 = vadd.f32 %v1200, 1.0
        %v1202 = vmul.f32 %v1201, 0.5
        %v1203 = vmul.f32 %v1193, %v1202
        %v1204 = vld [vmem:[%s13] sm:$0xff]
        %v1205 = vld [vmem:[%s13 + $0x8] sm:$0xff]
        %v1206 = vld [vmem:[%s13 + $0x10] sm:$0xff]
        %v1207 = vld [vmem:[%s13 + $0x18] sm:$0xff]
        %v1208 = vld [vmem:[%s13 + $0x20] sm:$0xff]
        %v1209 = vld [vmem:[%s13 + $0x28] sm:$0xff]
        %v1210 = vld [vmem:[%s13 + $0x30] sm:$0xff]
        %v1211 = vld [vmem:[%s13 + $0x38] sm:$0xff]
        %v1212 = vld [vmem:[%s13 + $0x40] sm:$0xff]
        %v1213 = vld [vmem:[%s13 + $0x48] sm:$0xff]
        %v1214 = vld [vmem:[%s13 + $0x50] sm:$0xff]
        %v1215 = vld [vmem:[%s13 + $0x58] sm:$0xff]
        %v1216 = vld [vmem:[%s13 + $0x60] sm:$0xff]
        %v1217 = vld [vmem:[%s13 + $0x68] sm:$0xff]
        %v1218 = vld [vmem:[%s13 + $0x70] sm:$0xff]
        %v1219 = vld [vmem:[%s13 + $0x78] sm:$0xff]
        %v1220 = vld [vmem:[%s14] sm:$0x1]
        %v1222 = vperm.slane %v1220, 0
        %1224 = vmatpush.msra.mxu0 %v1219
        %1225 = vmatpush.msra.mxu0 %v1218
        %1226 = vmatpush.msra.mxu0 %v1217
        %1227 = vmatpush.msra.mxu0 %v1216
        %1228 = vmatpush.msra.mxu0 %v1215
        %1229 = vmatpush.msra.mxu0 %v1214
        %1230 = vmatpush.msra.mxu0 %v1213
        %1231 = vmatpush.msra.mxu0 %v1212
        %1232 = vmatpush.msra.mxu0 %v1211
        %1233 = vmatpush.msra.mxu0 %v1210
        %1234 = vmatpush.msra.mxu0 %v1209
        %1235 = vmatpush.msra.mxu0 %v1208
        %1236 = vmatpush.msra.mxu0 %v1207
        %1237 = vmatpush.msra.mxu0 %v1206
        %1238 = vmatpush.msra.mxu0 %v1205
        %1239 = vmatpush.msra.mxu0 %v1204
        %1240 = vmatmul.f32.gmra.mxu0 %v1203
        %v1241 = vpop.f32.mrf.mxu0
        %v1242 = vadd.f32 %v1222, %v1241
        %1243 = vdwg.mxu0
        %v1244 = vadd.f32 %v1131, %v1242
        %s1245 = scalar_lea.vmem %s3, 1
        %v1246 = vld [vmem:[%s1245] sm:$0x1]
        %s1247 = scalar_lea.vmem %s4, 1
        %v1248 = vld [vmem:[%s1247] sm:$0x1]
        %v1249 = vsel %vm687, %v1244, 0.0
        %1250 = vadd.xlane.f32.xlu0 %v1249
        %v1251 = vpop.xlane.xlu0 %1250
        %v1252 = vmul.f32 %v1251, %v697
        %v1253 = vsub.f32 %v1244, %v1252
        %v1254 = vmul.f32 %v1253, %v1253
        %v1255 = vsel %vm687, %v1254, 0.0
        %1256 = vadd.xlane.f32.xlu0 %v1255
        %v1257 = vpop.xlane.xlu0 %1256
        %v1258 = vmul.f32 %v1257, %v697
        %v1259 = vadd.f32 %v1258, 1e-06
        %v1260 = vrsqrt.pop %v1259
        %v1261 = vmul.f32 %v1260, %v1259
        %v1262 = vmul.f32 %v1261, %v1260
        %v1263 = vmul.f32 0.5, %v1262
        %v1264 = vsub.f32 1.5, %v1263
        %v1265 = vmul.f32 %v1260, %v1264
        %vm1266 = vweird.f32 %v1259
        %vm1267 = vweird.f32 %v1260
        %vm1268 = vmor %vm1266, %vm1267
        %v1269 = vsel %vm1268, %v1260, %v1265
        %v1270 = vmul.f32 %v1253, %v1269
        %v1272 = vperm.slane %v1246, 0
        %v1274 = vmul.f32 %v1270, %v1272
        %v1276 = vperm.slane %v1248, 0
        %v1278 = vadd.f32 %v1274, %v1276
        %s1279 = scalar_lea.vmem %s5, 32
        %v1280 = vld [vmem:[%s1279] sm:$0xff]
        %v1281 = vld [vmem:[%s1279 + $0x8] sm:$0xff]
        %v1282 = vld [vmem:[%s1279 + $0x10] sm:$0xff]
        %v1283 = vld [vmem:[%s1279 + $0x18] sm:$0xff]
        %s1284 = scalar_lea.vmem %s6, 1
        %v1285 = vld [vmem:[%s1284] sm:$0x1]
        %v1287 = vperm.slane %v1285, 0
        %v1290 = vsel %vm733, %v1278, 0
        %1292 = vmatpush.msra.mxu0 0.0
        %1293 = vmatpush.msra.mxu0 0.0
        %1294 = vmatpush.msra.mxu0 0.0
        %1295 = vmatpush.msra.mxu0 0.0
        %1296 = vmatpush.msra.mxu0 0.0
        %1297 = vmatpush.msra.mxu0 0.0
        %1298 = vmatpush.msra.mxu0 0.0
        %1299 = vmatpush.msra.mxu0 0.0
        %1300 = vmatpush.msra.mxu0 0.0
        %1301 = vmatpush.msra.mxu0 0.0
        %1302 = vmatpush.msra.mxu0 0.0
        %1303 = vmatpush.msra.mxu0 0.0
        %1304 = vmatpush.msra.mxu0 %v1283
        %1305 = vmatpush.msra.mxu0 %v1282
        %1306 = vmatpush.msra.mxu0 %v1281
        %1307 = vmatpush.msra.mxu0 %v1280
        %1308 = vmatmul.f32.gmra.mxu0 %v1290
        %v1309 = vpop.f32.mrf.mxu0
        %v1310 = vadd.f32 %v1287, %v1309
        %1311 = vdwg.mxu0
        %s1312 = scalar_lea.vmem %s7, 32
        %v1313 = vld [vmem:[%s1312] sm:$0xff]
        %v1314 = vld [vmem:[%s1312 + $0x8] sm:$0xff]
        %v1315 = vld [vmem:[%s1312 + $0x10] sm:$0xff]
        %v1316 = vld [vmem:[%s1312 + $0x18] sm:$0xff]
        %1318 = vrot.lane.b32.xlu0 %v1310, 96
        %v1319 = vpop.permute.xlu0 %1318
        %v1320 = vsel %vm764, %v1310, 0
        %v1322 = vsel %vm764, %v1319, 0
        %1324 = vmatpush.xpose.msra.mxu0 0.0
        %1325 = vmatpush.xpose.msra.mxu0 0.0
        %1326 = vmatpush.xpose.msra.mxu0 0.0
        %1327 = vmatpush.xpose.msra.mxu0 0.0
        %1328 = vmatpush.xpose.msra.mxu0 0.0
        %1329 = vmatpush.xpose.msra.mxu0 0.0
        %1330 = vmatpush.xpose.msra.mxu0 0.0
        %1331 = vmatpush.xpose.msra.mxu0 0.0
        %1332 = vmatpush.xpose.msra.mxu0 0.0
        %1333 = vmatpush.xpose.msra.mxu0 0.0
        %1334 = vmatpush.xpose.msra.mxu0 0.0
        %1335 = vmatpush.xpose.msra.mxu0 0.0
        %1336 = vmatpush.xpose.msra.mxu0 0.0
        %1337 = vmatpush.xpose.msra.mxu0 0.0
        %1338 = vmatpush.xpose.msra.mxu0 0.0
        %1339 = vmatpush.xpose.msra.mxu0 %v1322
        %1340 = vmatmul.f32.gmra.mxu0 %v1320
        %v1341 = vpop.f32.mrf.mxu0
        %v1342 = vadd.f32 0.0, %v1341
        %1343 = vdwg.mxu0
        %v1344 = vmul.f32 %v1342, 0.35355338
        %v1345 = vsel %vm790, %v1344, -inf
        %1346 = vmax.xlane.f32.xlu0 %v1345
        %v1347 = vpop.xlane.xlu0 %1346
        %v1348 = vsub.f32 %v1344, %v1347
        %v1349 = vmul.f32 %v1348, 1.442695
        %v1350 = vpow.pop %v1349
        %v1351 = vsel %vm790, %v1350, 0.0
        %1352 = vadd.xlane.f32.xlu0 %v1351
        %v1353 = vpop.xlane.xlu0 %1352
        %v1354 = vrcp.pop %v1353
        %v1355 = vmul.f32 %v1350, %v1354
        %1356 = vrot.lane.b32.xlu0 %v1310, 64
        %v1357 = vpop.permute.xlu0 %1356
        %v1359 = vsel %vm804, %v1355, 0
        %v1361 = vsel %vm808, %v1357, 0
        %1363 = vmatpush.msra.mxu0 0.0
        %1364 = vmatpush.msra.mxu0 0.0
        %1365 = vmatpush.msra.mxu0 0.0
        %1366 = vmatpush.msra.mxu0 0.0
        %1367 = vmatpush.msra.mxu0 0.0
        %1368 = vmatpush.msra.mxu0 0.0
        %1369 = vmatpush.msra.mxu0 0.0
        %1370 = vmatpush.msra.mxu0 0.0
        %1371 = vmatpush.msra.mxu0 0.0
        %1372 = vmatpush.msra.mxu0 0.0
        %1373 = vmatpush.msra.mxu0 0.0
        %1374 = vmatpush.msra.mxu0 0.0
        %1375 = vmatpush.msra.mxu0 0.0
        %1376 = vmatpush.msra.mxu0 0.0
        %1377 = vmatpush.msra.mxu0 0.0
        %1378 = vmatpush.msra.mxu0 %v1361
        %1379 = vmatmul.f32.gmra.mxu0 %v1359
        %v1380 = vpop.f32.mrf.mxu0
        %v1381 = vadd.f32 0.0, %v1380
        %1382 = vdwg.mxu0
        %1383 = vrot.lane.b32.xlu0 %v1310, 120
        %v1384 = vpop.permute.xlu0 %1383
        %1385 = vrot.lane.b32.xlu0 %v1310, 88
        %v1386 = vpop.permute.xlu0 %1385
        %v1387 = vsel %vm764, %v1384, 0
        %v1389 = vsel %vm764, %v1386, 0
        %1391 = vmatpush.xpose.msra.mxu0 0.0
        %1392 = vmatpush.xpose.msra.mxu0 0.0
        %1393 = vmatpush.xpose.msra.mxu0 0.0
        %1394 = vmatpush.xpose.msra.mxu0 0.0
        %1395 = vmatpush.xpose.msra.mxu0 0.0
        %1396 = vmatpush.xpose.msra.mxu0 0.0
        %1397 = vmatpush.xpose.msra.mxu0 0.0
        %1398 = vmatpush.xpose.msra.mxu0 0.0
        %1399 = vmatpush.xpose.msra.mxu0 0.0
        %1400 = vmatpush.xpose.msra.mxu0 0.0
        %1401 = vmatpush.xpose.msra.mxu0 0.0
        %1402 = vmatpush.xpose.msra.mxu0 0.0
        %1403 = vmatpush.xpose.msra.mxu0 0.0
        %1404 = vmatpush.xpose.msra.mxu0 0.0
        %1405 = vmatpush.xpose.msra.mxu0 0.0
        %1406 = vmatpush.xpose.msra.mxu0 %v1389
        %1407 = vmatmul.f32.gmra.mxu0 %v1387
        %v1408 = vpop.f32.mrf.mxu0
        %v1409 = vadd.f32 0.0, %v1408
        %1410 = vdwg.mxu0
        %v1411 = vmul.f32 %v1409, 0.35355338
        %v1412 = vsel %vm790, %v1411, -inf
        %1413 = vmax.xlane.f32.xlu0 %v1412
        %v1414 = vpop.xlane.xlu0 %1413
        %v1415 = vsub.f32 %v1411, %v1414
        %v1416 = vmul.f32 %v1415, 1.442695
        %v1417 = vpow.pop %v1416
        %v1418 = vsel %vm790, %v1417, 0.0
        %1419 = vadd.xlane.f32.xlu0 %v1418
        %v1420 = vpop.xlane.xlu0 %1419
        %v1421 = vrcp.pop %v1420
        %v1422 = vmul.f32 %v1417, %v1421
        %1423 = vrot.lane.b32.xlu0 %v1310, 56
        %v1424 = vpop.permute.xlu0 %1423
        %v1426 = vsel %vm804, %v1422, 0
        %v1428 = vsel %vm808, %v1424, 0
        %1430 = vmatpush.msra.mxu0 0.0
        %1431 = vmatpush.msra.mxu0 0.0
        %1432 = vmatpush.msra.mxu0 0.0
        %1433 = vmatpush.msra.mxu0 0.0
        %1434 = vmatpush.msra.mxu0 0.0
        %1435 = vmatpush.msra.mxu0 0.0
        %1436 = vmatpush.msra.mxu0 0.0
        %1437 = vmatpush.msra.mxu0 0.0
        %1438 = vmatpush.msra.mxu0 0.0
        %1439 = vmatpush.msra.mxu0 0.0
        %1440 = vmatpush.msra.mxu0 0.0
        %1441 = vmatpush.msra.mxu0 0.0
        %1442 = vmatpush.msra.mxu0 0.0
        %1443 = vmatpush.msra.mxu0 0.0
        %1444 = vmatpush.msra.mxu0 0.0
        %1445 = vmatpush.msra.mxu0 %v1428
        %1446 = vmatmul.f32.gmra.mxu0 %v1426
        %v1447 = vpop.f32.mrf.mxu0
        %v1448 = vadd.f32 0.0, %v1447
        %1449 = vdwg.mxu0
        %v1451 = vsel %vm764, %v1448, 0
        %1453 = vmatpush.msra.mxu0 0.0
        %1454 = vmatpush.msra.mxu0 0.0
        %1455 = vmatpush.msra.mxu0 0.0
        %1456 = vmatpush.msra.mxu0 0.0
        %1457 = vmatpush.msra.mxu0 0.0
        %1458 = vmatpush.msra.mxu0 0.0
        %1459 = vmatpush.msra.mxu0 0.0
        %1460 = vmatpush.msra.mxu0 0.0
        %1461 = vmatpush.msra.mxu0 0.0
        %1462 = vmatpush.msra.mxu0 0.0
        %1463 = vmatpush.msra.mxu0 0.0
        %1464 = vmatpush.msra.mxu0 0.0
        %1465 = vmatpush.msra.mxu0 0.0
        %1466 = vmatpush.msra.mxu0 0.0
        %1467 = vmatpush.msra.mxu0 0.0
        %1468 = vmatpush.msra.mxu0 %v1314
        %1469 = vmatmul.f32.gmra.mxu0 %v1451
        %v1470 = vpop.f32.mrf.mxu0
        %v1471 = vadd.f32 0.0, %v1470
        %1472 = vdwg.mxu0
        %v1474 = vsel %vm764, %v1381, 0
        %1476 = vmatpush.msra.mxu0 0.0
        %1477 = vmatpush.msra.mxu0 0.0
        %1478 = vmatpush.msra.mxu0 0.0
        %1479 = vmatpush.msra.mxu0 0.0
        %1480 = vmatpush.msra.mxu0 0.0
        %1481 = vmatpush.msra.mxu0 0.0
        %1482 = vmatpush.msra.mxu0 0.0
        %1483 = vmatpush.msra.mxu0 0.0
        %1484 = vmatpush.msra.mxu0 0.0
        %1485 = vmatpush.msra.mxu0 0.0
        %1486 = vmatpush.msra.mxu0 0.0
        %1487 = vmatpush.msra.mxu0 0.0
        %1488 = vmatpush.msra.mxu0 0.0
        %1489 = vmatpush.msra.mxu0 0.0
        %1490 = vmatpush.msra.mxu0 0.0
        %1491 = vmatpush.msra.mxu0 %v1313
        %1492 = vmatmul.f32.gmra.mxu0 %v1474
        %v1493 = vpop.f32.mrf.mxu0
        %v1494 = vadd.f32 %v1471, %v1493
        %1495 = vdwg.mxu0
        %1496 = vrot.lane.b32.xlu0 %v1310, 112
        %v1497 = vpop.permute.xlu0 %1496
        %1498 = vrot.lane.b32.xlu0 %v1310, 80
        %v1499 = vpop.permute.xlu0 %1498
        %v1500 = vsel %vm764, %v1497, 0
        %v1502 = vsel %vm764, %v1499, 0
        %1504 = vmatpush.xpose.msra.mxu0 0.0
        %1505 = vmatpush.xpose.msra.mxu0 0.0
        %1506 = vmatpush.xpose.msra.mxu0 0.0
        %1507 = vmatpush.xpose.msra.mxu0 0.0
        %1508 = vmatpush.xpose.msra.mxu0 0.0
        %1509 = vmatpush.xpose.msra.mxu0 0.0
        %1510 = vmatpush.xpose.msra.mxu0 0.0
        %1511 = vmatpush.xpose.msra.mxu0 0.0
        %1512 = vmatpush.xpose.msra.mxu0 0.0
        %1513 = vmatpush.xpose.msra.mxu0 0.0
        %1514 = vmatpush.xpose.msra.mxu0 0.0
        %1515 = vmatpush.xpose.msra.mxu0 0.0
        %1516 = vmatpush.xpose.msra.mxu0 0.0
        %1517 = vmatpush.xpose.msra.mxu0 0.0
        %1518 = vmatpush.xpose.msra.mxu0 0.0
        %1519 = vmatpush.xpose.msra.mxu0 %v1502
        %1520 = vmatmul.f32.gmra.mxu0 %v1500
        %v1521 = vpop.f32.mrf.mxu0
        %v1522 = vadd.f32 0.0, %v1521
        %1523 = vdwg.mxu0
        %v1524 = vmul.f32 %v1522, 0.35355338
        %v1525 = vsel %vm790, %v1524, -inf
        %1526 = vmax.xlane.f32.xlu0 %v1525
        %v1527 = vpop.xlane.xlu0 %1526
        %v1528 = vsub.f32 %v1524, %v1527
        %v1529 = vmul.f32 %v1528, 1.442695
        %v1530 = vpow.pop %v1529
        %v1531 = vsel %vm790, %v1530, 0.0
        %1532 = vadd.xlane.f32.xlu0 %v1531
        %v1533 = vpop.xlane.xlu0 %1532
        %v1534 = vrcp.pop %v1533
        %v1535 = vmul.f32 %v1530, %v1534
        %1536 = vrot.lane.b32.xlu0 %v1310, 48
        %v1537 = vpop.permute.xlu0 %1536
        %v1539 = vsel %vm804, %v1535, 0
        %v1541 = vsel %vm808, %v1537, 0
        %1543 = vmatpush.msra.mxu0 0.0
        %1544 = vmatpush.msra.mxu0 0.0
        %1545 = vmatpush.msra.mxu0 0.0
        %1546 = vmatpush.msra.mxu0 0.0
        %1547 = vmatpush.msra.mxu0 0.0
        %1548 = vmatpush.msra.mxu0 0.0
        %1549 = vmatpush.msra.mxu0 0.0
        %1550 = vmatpush.msra.mxu0 0.0
        %1551 = vmatpush.msra.mxu0 0.0
        %1552 = vmatpush.msra.mxu0 0.0
        %1553 = vmatpush.msra.mxu0 0.0
        %1554 = vmatpush.msra.mxu0 0.0
        %1555 = vmatpush.msra.mxu0 0.0
        %1556 = vmatpush.msra.mxu0 0.0
        %1557 = vmatpush.msra.mxu0 0.0
        %1558 = vmatpush.msra.mxu0 %v1541
        %1559 = vmatmul.f32.gmra.mxu0 %v1539
        %v1560 = vpop.f32.mrf.mxu0
        %v1561 = vadd.f32 0.0, %v1560
        %1562 = vdwg.mxu0
        %v1564 = vsel %vm764, %v1561, 0
        %1566 = vmatpush.msra.mxu0 0.0
        %1567 = vmatpush.msra.mxu0 0.0
        %1568 = vmatpush.msra.mxu0 0.0
        %1569 = vmatpush.msra.mxu0 0.0
        %1570 = vmatpush.msra.mxu0 0.0
        %1571 = vmatpush.msra.mxu0 0.0
        %1572 = vmatpush.msra.mxu0 0.0
        %1573 = vmatpush.msra.mxu0 0.0
        %1574 = vmatpush.msra.mxu0 0.0
        %1575 = vmatpush.msra.mxu0 0.0
        %1576 = vmatpush.msra.mxu0 0.0
        %1577 = vmatpush.msra.mxu0 0.0
        %1578 = vmatpush.msra.mxu0 0.0
        %1579 = vmatpush.msra.mxu0 0.0
        %1580 = vmatpush.msra.mxu0 0.0
        %1581 = vmatpush.msra.mxu0 %v1315
        %1582 = vmatmul.f32.gmra.mxu0 %v1564
        %v1583 = vpop.f32.mrf.mxu0
        %v1584 = vadd.f32 0.0, %v1583
        %1585 = vdwg.mxu0
        %v1586 = vadd.f32 %v1494, %v1584
        %1587 = vrot.lane.b32.xlu0 %v1310, 104
        %v1588 = vpop.permute.xlu0 %1587
        %1589 = vrot.lane.b32.xlu0 %v1310, 72
        %v1590 = vpop.permute.xlu0 %1589
        %v1591 = vsel %vm764, %v1588, 0
        %v1593 = vsel %vm764, %v1590, 0
        %1595 = vmatpush.xpose.msra.mxu0 0.0
        %1596 = vmatpush.xpose.msra.mxu0 0.0
        %1597 = vmatpush.xpose.msra.mxu0 0.0
        %1598 = vmatpush.xpose.msra.mxu0 0.0
        %1599 = vmatpush.xpose.msra.mxu0 0.0
        %1600 = vmatpush.xpose.msra.mxu0 0.0
        %1601 = vmatpush.xpose.msra.mxu0 0.0
        %1602 = vmatpush.xpose.msra.mxu0 0.0
        %1603 = vmatpush.xpose.msra.mxu0 0.0
        %1604 = vmatpush.xpose.msra.mxu0 0.0
        %1605 = vmatpush.xpose.msra.mxu0 0.0
        %1606 = vmatpush.xpose.msra.mxu0 0.0
        %1607 = vmatpush.xpose.msra.mxu0 0.0
        %1608 = vmatpush.xpose.msra.mxu0 0.0
        %1609 = vmatpush.xpose.msra.mxu0 0.0
        %1610 = vmatpush.xpose.msra.mxu0 %v1593
        %1611 = vmatmul.f32.gmra.mxu0 %v1591
        %v1612 = vpop.f32.mrf.mxu0
        %v1613 = vadd.f32 0.0, %v1612
        %1614 = vdwg.mxu0
        %v1615 = vmul.f32 %v1613, 0.35355338
        %v1616 = vsel %vm790, %v1615, -inf
        %1617 = vmax.xlane.f32.xlu0 %v1616
        %v1618 = vpop.xlane.xlu0 %1617
        %v1619 = vsub.f32 %v1615, %v1618
        %v1620 = vmul.f32 %v1619, 1.442695
        %v1621 = vpow.pop %v1620
        %v1622 = vsel %vm790, %v1621, 0.0
        %1623 = vadd.xlane.f32.xlu0 %v1622
        %v1624 = vpop.xlane.xlu0 %1623
        %v1625 = vrcp.pop %v1624
        %v1626 = vmul.f32 %v1621, %v1625
        %1627 = vrot.lane.b32.xlu0 %v1310, 40
        %v1628 = vpop.permute.xlu0 %1627
        %v1630 = vsel %vm804, %v1626, 0
        %v1632 = vsel %vm808, %v1628, 0
        %1634 = vmatpush.msra.mxu0 0.0
        %1635 = vmatpush.msra.mxu0 0.0
        %1636 = vmatpush.msra.mxu0 0.0
        %1637 = vmatpush.msra.mxu0 0.0
        %1638 = vmatpush.msra.mxu0 0.0
        %1639 = vmatpush.msra.mxu0 0.0
        %1640 = vmatpush.msra.mxu0 0.0
        %1641 = vmatpush.msra.mxu0 0.0
        %1642 = vmatpush.msra.mxu0 0.0
        %1643 = vmatpush.msra.mxu0 0.0
        %1644 = vmatpush.msra.mxu0 0.0
        %1645 = vmatpush.msra.mxu0 0.0
        %1646 = vmatpush.msra.mxu0 0.0
        %1647 = vmatpush.msra.mxu0 0.0
        %1648 = vmatpush.msra.mxu0 0.0
        %1649 = vmatpush.msra.mxu0 %v1632
        %1650 = vmatmul.f32.gmra.mxu0 %v1630
        %v1651 = vpop.f32.mrf.mxu0
        %v1652 = vadd.f32 0.0, %v1651
        %1653 = vdwg.mxu0
        %v1655 = vsel %vm764, %v1652, 0
        %1657 = vmatpush.msra.mxu0 0.0
        %1658 = vmatpush.msra.mxu0 0.0
        %1659 = vmatpush.msra.mxu0 0.0
        %1660 = vmatpush.msra.mxu0 0.0
        %1661 = vmatpush.msra.mxu0 0.0
        %1662 = vmatpush.msra.mxu0 0.0
        %1663 = vmatpush.msra.mxu0 0.0
        %1664 = vmatpush.msra.mxu0 0.0
        %1665 = vmatpush.msra.mxu0 0.0
        %1666 = vmatpush.msra.mxu0 0.0
        %1667 = vmatpush.msra.mxu0 0.0
        %1668 = vmatpush.msra.mxu0 0.0
        %1669 = vmatpush.msra.mxu0 0.0
        %1670 = vmatpush.msra.mxu0 0.0
        %1671 = vmatpush.msra.mxu0 0.0
        %1672 = vmatpush.msra.mxu0 %v1316
        %1673 = vmatmul.f32.gmra.mxu0 %v1655
        %v1674 = vpop.f32.mrf.mxu0
        %v1675 = vadd.f32 0.0, %v1674
        %1676 = vdwg.mxu0
        %v1677 = vadd.f32 %v1586, %v1675
        %v1678 = vadd.f32 %v1244, %v1677
        %s1679 = scalar_lea.vmem %s8, 1
        %v1680 = vld [vmem:[%s1679] sm:$0x1]
        %v1682 = vperm.slane %v1680, 0
        %v1684 = vadd.f32 %v1678, %v1682
        %s1685 = scalar_lea.vmem %s9, 1
        %v1686 = vld [vmem:[%s1685] sm:$0x1]
        %s1687 = scalar_lea.vmem %s10, 1
        %v1688 = vld [vmem:[%s1687] sm:$0x1]
        %v1689 = vsel %vm687, %v1684, 0.0
        %1690 = vadd.xlane.f32.xlu0 %v1689
        %v1691 = vpop.xlane.xlu0 %1690
        %v1692 = vmul.f32 %v1691, %v697
        %v1693 = vsub.f32 %v1684, %v1692
        %v1694 = vmul.f32 %v1693, %v1693
        %v1695 = vsel %vm687, %v1694, 0.0
        %1696 = vadd.xlane.f32.xlu0 %v1695
        %v1697 = vpop.xlane.xlu0 %1696
        %v1698 = vmul.f32 %v1697, %v697
        %v1699 = vadd.f32 %v1698, 1e-06
        %v1700 = vrsqrt.pop %v1699
        %v1701 = vmul.f32 %v1700, %v1699
        %v1702 = vmul.f32 %v1701, %v1700
        %v1703 = vmul.f32 0.5, %v1702
        %v1704 = vsub.f32 1.5, %v1703
        %v1705 = vmul.f32 %v1700, %v1704
        %vm1706 = vweird.f32 %v1699
        %vm1707 = vweird.f32 %v1700
        %vm1708 = vmor %vm1706, %vm1707
        %v1709 = vsel %vm1708, %v1700, %v1705
        %v1710 = vmul.f32 %v1693, %v1709
        %v1712 = vperm.slane %v1686, 0
        %v1714 = vmul.f32 %v1710, %v1712
        %v1716 = vperm.slane %v1688, 0
        %v1718 = vadd.f32 %v1714, %v1716
        %s1719 = scalar_lea.vmem %s11, 32
        %v1720 = vld [vmem:[%s1719] sm:$0xff]
        %v1721 = vld [vmem:[%s1719 + $0x8] sm:$0xff]
        %v1722 = vld [vmem:[%s1719 + $0x10] sm:$0xff]
        %v1723 = vld [vmem:[%s1719 + $0x18] sm:$0xff]
        %s1724 = scalar_lea.vmem %s12, 1
        %v1725 = vld [vmem:[%s1724] sm:$0x1]
        %v1727 = vperm.slane %v1725, 0
        %v1730 = vsel %vm733, %v1718, 0
        %1732 = vmatpush.msra.mxu0 0.0
        %1733 = vmatpush.msra.mxu0 0.0
        %1734 = vmatpush.msra.mxu0 0.0
        %1735 = vmatpush.msra.mxu0 0.0
        %1736 = vmatpush.msra.mxu0 0.0
        %1737 = vmatpush.msra.mxu0 0.0
        %1738 = vmatpush.msra.mxu0 0.0
        %1739 = vmatpush.msra.mxu0 0.0
        %1740 = vmatpush.msra.mxu0 0.0
        %1741 = vmatpush.msra.mxu0 0.0
        %1742 = vmatpush.msra.mxu0 0.0
        %1743 = vmatpush.msra.mxu0 0.0
        %1744 = vmatpush.msra.mxu0 %v1723
        %1745 = vmatpush.msra.mxu0 %v1722
        %1746 = vmatpush.msra.mxu0 %v1721
        %1747 = vmatpush.msra.mxu0 %v1720
        %1748 = vmatmul.f32.gmra.mxu0 %v1730
        %v1749 = vpop.f32.mrf.mxu0
        %v1750 = vadd.f32 %v1727, %v1749
        %1751 = vdwg.mxu0
        %v1752 = vmul.f32 %v1750, %v1750
        %v1753 = vmul.f32 %v1750, %v1752
        %v1754 = vmul.f32 %v1753, 0.044715
        %v1755 = vadd.f32 %v1750, %v1754
        %v1756 = vmul.f32 %v1755, 0.7978846
        %v1757 = vtanh.pop %v1756
        %v1758 = vadd.f32 %v1757, 1.0
        %v1759 = vmul.f32 %v1758, 0.5
        %v1760 = vmul.f32 %v1750, %v1759
        %s1761 = scalar_lea.vmem %s13, 128
        %v1762 = vld [vmem:[%s1761] sm:$0xff]
        %v1763 = vld [vmem:[%s1761 + $0x8] sm:$0xff]
        %v1764 = vld [vmem:[%s1761 + $0x10] sm:$0xff]
        %v1765 = vld [vmem:[%s1761 + $0x18] sm:$0xff]
        %v1766 = vld [vmem:[%s1761 + $0x20] sm:$0xff]
        %v1767 = vld [vmem:[%s1761 + $0x28] sm:$0xff]
        %v1768 = vld [vmem:[%s1761 + $0x30] sm:$0xff]
        %v1769 = vld [vmem:[%s1761 + $0x38] sm:$0xff]
        %v1770 = vld [vmem:[%s1761 + $0x40] sm:$0xff]
        %v1771 = vld [vmem:[%s1761 + $0x48] sm:$0xff]
        %v1772 = vld [vmem:[%s1761 + $0x50] sm:$0xff]
        %v1773 = vld [vmem:[%s1761 + $0x58] sm:$0xff]
        %v1774 = vld [vmem:[%s1761 + $0x60] sm:$0xff]
        %v1775 = vld [vmem:[%s1761 + $0x68] sm:$0xff]
        %v1776 = vld [vmem:[%s1761 + $0x70] sm:$0xff]
        %v1777 = vld [vmem:[%s1761 + $0x78] sm:$0xff]
        %s1778 = scalar_lea.vmem %s14, 1
        %v1779 = vld [vmem:[%s1778] sm:$0x1]
        %v1781 = vperm.slane %v1779, 0
        %1783 = vmatpush.msra.mxu0 %v1777
        %1784 = vmatpush.msra.mxu0 %v1776
        %1785 = vmatpush.msra.mxu0 %v1775
        %1786 = vmatpush.msra.mxu0 %v1774
        %1787 = vmatpush.msra.mxu0 %v1773
        %1788 = vmatpush.msra.mxu0 %v1772
        %1789 = vmatpush.msra.mxu0 %v1771
        %1790 = vmatpush.msra.mxu0 %v1770
        %1791 = vmatpush.msra.mxu0 %v1769
        %1792 = vmatpush.msra.mxu0 %v1768
        %1793 = vmatpush.msra.mxu0 %v1767
        %1794 = vmatpush.msra.mxu0 %v1766
        %1795 = vmatpush.msra.mxu0 %v1765
        %1796 = vmatpush.msra.mxu0 %v1764
        %1797 = vmatpush.msra.mxu0 %v1763
        %1798 = vmatpush.msra.mxu0 %v1762
        %1799 = vmatmul.f32.gmra.mxu0 %v1760
        %v1800 = vpop.f32.mrf.mxu0
        %v1801 = vadd.f32 %v1781, %v1800
        %1802 = vdwg.mxu0
        %v1803 = vadd.f32 %v1684, %v1801
        %v1804 = vld [vmem:[%s15] sm:$0x1]
        %v1805 = vld [vmem:[%s16] sm:$0x1]
        %v1806 = vsel %vm687, %v1803, 0.0
        %1807 = vadd.xlane.f32.xlu0 %v1806
        %v1808 = vpop.xlane.xlu0 %1807
        %v1809 = vmul.f32 %v1808, %v697
        %v1810 = vsub.f32 %v1803, %v1809
        %v1811 = vmul.f32 %v1810, %v1810
        %v1812 = vsel %vm687, %v1811, 0.0
        %1813 = vadd.xlane.f32.xlu0 %v1812
        %v1814 = vpop.xlane.xlu0 %1813
        %v1815 = vmul.f32 %v1814, %v697
        %v1816 = vadd.f32 %v1815, 1e-06
        %v1817 = vrsqrt.pop %v1816
        %v1818 = vmul.f32 %v1817, %v1816
        %v1819 = vmul.f32 %v1818, %v1817
        %v1820 = vmul.f32 0.5, %v1819
        %v1821 = vsub.f32 1.5, %v1820
        %v1822 = vmul.f32 %v1817, %v1821
        %vm1823 = vweird.f32 %v1816
        %vm1824 = vweird.f32 %v1817
        %vm1825 = vmor %vm1823, %vm1824
        %v1826 = vsel %vm1825, %v1817, %v1822
        %v1827 = vmul.f32 %v1810, %v1826
        %v1829 = vperm.slane %v1804, 0
        %v1831 = vmul.f32 %v1827, %v1829
        %v1833 = vperm.slane %v1805, 0
        %v1835 = vadd.f32 %v1831, %v1833
        %v1837 = vrot.slane %v1835, 1
        %v1839 = vadd.f32 %v1835, %v1837
        %v1840 = vmul.f32 %v1839, 0.5
        %v1841 = vld [vmem:[%s17] sm:$0x1]
        %v1842 = vld [vmem:[%s18] sm:$0x1]
        %vm1843 = vcmask 253952
        %v1844 = vsel %vm1843, %v1840, 0.0
        %1845 = vadd.xlane.f32.xlu0 %v1844
        %v1846 = vpop.xlane.xlu0 %1845
        %v1847 = vmul.f32 %v1846, %v697
        %v1848 = vsub.f32 %v1840, %v1847
        %v1849 = vmul.f32 %v1848, %v1848
        %v1850 = vsel %vm1843, %v1849, 0.0
        %1851 = vadd.xlane.f32.xlu0 %v1850
        %v1852 = vpop.xlane.xlu0 %1851
        %v1853 = vmul.f32 %v1852, %v697
        %v1854 = vadd.f32 %v1853, 1e-06
        %v1855 = vrsqrt.pop %v1854
        %v1856 = vmul.f32 %v1855, %v1854
        %v1857 = vmul.f32 %v1856, %v1855
        %v1858 = vmul.f32 0.5, %v1857
        %v1859 = vsub.f32 1.5, %v1858
        %v1860 = vmul.f32 %v1855, %v1859
        %vm1861 = vweird.f32 %v1854
        %vm1862 = vweird.f32 %v1855
        %vm1863 = vmor %vm1861, %vm1862
        %v1864 = vsel %vm1863, %v1855, %v1860
        %v1865 = vmul.f32 %v1848, %v1864
        %v1866 = vmul.f32 %v1865, %v1841
        %v1867 = vadd.f32 %v1866, %v1842
        %v1868 = vld [vmem:[%s19] sm:$0xff]
        %v1869 = vld [vmem:[%s19 + $0x8] sm:$0xff]
        %v1870 = vld [vmem:[%s19 + $0x10] sm:$0xff]
        %v1871 = vld [vmem:[%s19 + $0x18] sm:$0xff]
        %v1872 = vld [vmem:[%s20] sm:$0x1]
        %v1874 = vsel %vm733, %v1867, 0
        %1876 = vmatpush.msra.mxu0 0.0
        %1877 = vmatpush.msra.mxu0 0.0
        %1878 = vmatpush.msra.mxu0 0.0
        %1879 = vmatpush.msra.mxu0 0.0
        %1880 = vmatpush.msra.mxu0 0.0
        %1881 = vmatpush.msra.mxu0 0.0
        %1882 = vmatpush.msra.mxu0 0.0
        %1883 = vmatpush.msra.mxu0 0.0
        %1884 = vmatpush.msra.mxu0 0.0
        %1885 = vmatpush.msra.mxu0 0.0
        %1886 = vmatpush.msra.mxu0 0.0
        %1887 = vmatpush.msra.mxu0 0.0
        %1888 = vmatpush.msra.mxu0 %v1871
        %1889 = vmatpush.msra.mxu0 %v1870
        %1890 = vmatpush.msra.mxu0 %v1869
        %1891 = vmatpush.msra.mxu0 %v1868
        %1892 = vmatmul.f32.gmra.mxu0 %v1874
        %v1893 = vpop.f32.mrf.mxu0
        %v1894 = vadd.f32 %v1872, %v1893
        %1895 = vdwg.mxu0
        %vm1896 = vcmask 73728
        %1897 = vst.msk [vmem:[%s646] sm:$0x1] %vm1896, %v1894
        %s1898 = sand.u32 %s489, 1
        %s1899 = scalar_lea.sflag [#allocation3], %s1898
        %s1900 = sand.u32 %s489, 1
        %s1901 = scalar_lea.vmem [#allocation2], %s1900
        // Predicated region
        $region105: #{demucast_forward.1} parent=103 // pred_check
          %p1902 = pneg %p499
        $region106: #{demucast_forward.1} parent=103 // pred_check_branch
          %1904 = sbr.rel (%p1902) target = $region108
        $region107: #{demucast_forward.1} parent=103 // pred_region
          %1906 = vsyncadd %s1899, 0
          %s1907 = scalar_lea.hbm %s21, %s35
          %s1909 = sshll.u32 %s1901, 4
          %s1910 = int_to_ptr.vmem [resolvable:$true] %s1909
          %s1911 = sshll.u32 %s1907, 4
          %s1912 = int_to_ptr.hbm [resolvable:$true] %s1911
          %1914 = dma.vmem_to_hbm [thread:$0]  %s1910, 16, %s1912, %s1899
        $region108: #{demucast_forward.1} parent=103 // pred_fallthru
          _
      $region104: #{demucast_forward.1} parent=5 // pred_fallthru
        _
      %p1915 = scmp.le.s32.totalorder 2, %s30
      // Predicated region
      $region109: #{demucast_forward.1} parent=5 // pred_check
        %p1916 = pneg %p1915
      $region110: #{demucast_forward.1} parent=5 // pred_check_branch
        %1918 = sbr.rel (%p1916) target = $region112
      $region111: #{demucast_forward.1} parent=5 // pred_region
        %s1919 = ssub.s32 %s30, 2
        // Predicated region
        $region113: #{demucast_forward.1} parent=111 // pred_check
          %p1920 = pneg %p505
        $region114: #{demucast_forward.1} parent=111 // pred_check_branch
          %1922 = sbr.rel (%p1920) target = $region116
        $region115: #{demucast_forward.1} parent=111 // pred_region
          %s1923 = sand.u32 %s490, 1
          %s1924 = scalar_lea.sflag [#allocation3], %s1923
          %s1925 = sand.u32 %s490, 1
          %s1926 = scalar_lea.vmem [#allocation2], %s1925
          %1928 = dma.done %s1924, 16
        $region116: #{demucast_forward.1} parent=111 // pred_fallthru
          _
      $region112: #{demucast_forward.1} parent=5 // pred_fallthru
        _
    $region6: #{demucast_forward.1} parent=1 // loop_footer
      %s34 = sadd.s32 1, %s30
    $region7: #{demucast_forward.1} parent=1 // loop_footer_branch
      %29 = sbr.rel target = $region3
    $region8: #{demucast_forward.1} parent=1 // loop_exit
      _
    %1929 = vsyncpa [#allocation3], 1
    %s1930 = scalar_lea.sflag [#allocation3], 1
    %1931 = vsyncpa %s1930, 1

</llo_original>
